<compile_context>
chip_gen: v6e
topology: v6e:2x2x1
jax: 0.10.0
libtpu: 0.0.40
codegen_flags: <defaults>
</compile_context>

<pallas_src>
import math
import numpy as np
import jax
import jax.numpy as jnp
from jax import lax
from jax.experimental import pallas as pl
from jax.experimental.pallas import tpu as pltpu

STAGE_NUM = 3
BN_EPS = 1e-5


# ----------------------------------------------------------------------------- helpers

def _softmax_over_k(zt):
    """Softmax over the K (sublane) axis of a (K, N) tile. Exact normalizer (parity)."""
    zt = jnp.exp(zt - jnp.max(zt, axis=0, keepdims=True))
    return zt / jnp.sum(zt, axis=0, keepdims=True)


def _em_update(mu, yb):
    """One EM step on resident y.

    mu: (K, C) f32 bases.  yb: (C, Nt) bf16 conv1 features.
    Returns (zt, mu_new): zt is the (K, Nt) responsibilities computed from the *input*
    mu (this is what the final projection consumes), mu_new the l2-normalized update.
    """
    f32 = jnp.float32
    bf16 = jnp.bfloat16
    zt = jnp.dot(mu.astype(bf16), yb, preferred_element_type=f32)          # (K, Nt)
    zt = _softmax_over_k(zt)
    # numer[k,c] = sum_n z[k,n] * y[c,n]: contract N of both operands so only the small
    # (K, Nt) operand needs a transpose -- no persistent (Nt, C) y^T buffer.
    numer = lax.dot_general(zt.astype(bf16), yb, (((1,), (1,)), ((), ())),
                            preferred_element_type=f32)                    # (K, C)
    denom = jnp.sum(zt, axis=1, keepdims=True)                             # (K, 1)
    mu_new = numer / (1e-6 + denom)
    # torch _l2norm: mu / (1e-6 + ||mu||_2)  (norm over channels = lane axis here)
    mu_new = mu_new / (1e-6 + jnp.sqrt(jnp.sum(mu_new * mu_new, axis=1, keepdims=True)))
    return zt, mu_new


# ---------------------------------------------------------------- fused whole-batch path

def _emau_fused_kernel(x_ref, w1_ref, b1_ref, mu0_ref, w2_ref, bnb_ref,
                       out_ref, mu_out_ref):
    f32 = jnp.float32
    bf16 = jnp.bfloat16

    # conv1 (1x1 == channel matmul). x is read here (as bf16) and re-read only at the
    # residual add, so the f32 (C, N) block value is not pinned live across the EM loop.
    y = jnp.dot(w1_ref[...], x_ref[0].astype(bf16),
                preferred_element_type=f32) + b1_ref[...]                  # (C, N) f32
    yb = y.astype(bf16)                                                    # only bf16 copy stays live

    mu = mu0_ref[...]                                                      # (K, C) f32
    zt = None
    for _ in range(STAGE_NUM):
        zt, mu = _em_update(mu, yb)

    # x2 = mu^T @ z^T : (C, N); only the tiny (K, C) mu gets transposed. Then ReLU.
    x2 = jnp.dot(jnp.transpose(mu).astype(bf16), zt.astype(bf16),
                 preferred_element_type=f32)
    x2 = jnp.maximum(x2, 0.0)

    # conv2 (1x1, BN scale pre-folded into w2) + BN bias + residual + ReLU
    y2 = jnp.dot(w2_ref[...], x2.astype(bf16),
                 preferred_element_type=f32) + bnb_ref[...]
    out_ref[0] = jnp.maximum(y2 + x_ref[0].astype(f32), 0.0).astype(out_ref.dtype)
    mu_out_ref[0] = mu                                                     # (K, C)


# ------------------------------------------------------------ N-tiled two-pass path

def _emau_em_kernel(x_ref, w1_ref, b1_ref, mu0_ref, mu2_ref, y_sc):
    """Pass 1: build resident bf16 y tile-by-tile; run the EM loop at the last N-tile."""
    f32 = jnp.float32
    bf16 = jnp.bfloat16
    t = pl.program_id(1)
    nt = pl.num_programs(1)
    tn = x_ref.shape[2]

    # conv1 on this N-tile; park the bf16 result in the resident (C, N) scratch.
    y = jnp.dot(w1_ref[...], x_ref[0].astype(bf16),
                preferred_element_type=f32) + b1_ref[...]
    col0 = pl.multiple_of(t * tn, 128)
    y_sc[:, pl.ds(col0, tn)] = y.astype(bf16)

    @pl.when(t == nt - 1)
    def _():
        yb = y_sc[...]                         # (C, N) bf16 fully resident in VMEM
        mu = mu0_ref[...]                      # (K, C) f32
        mu_prev = mu
        for _ in range(STAGE_NUM):
            mu_prev = mu
            _, mu = _em_update(mu, yb)
        mu2_ref[0, 0] = mu_prev                # bases that produced the final z
        mu2_ref[0, 1] = mu                     # final (returned) bases


def _emau_out_kernel(x_ref, w1_ref, b1_ref, mu2_ref, w2_ref, bnb_ref, out_ref):
    """Pass 2: per N-tile, recompute conv1 + final z, project, conv2 + residual + ReLU."""
    f32 = jnp.float32
    bf16 = jnp.bfloat16

    y = jnp.dot(w1_ref[...], x_ref[0].astype(bf16),
                preferred_element_type=f32) + b1_ref[...]                  # recompute conv1
    yb = y.astype(bf16)

    mu_prev = mu2_ref[0, 0]                                                # (K, C)
    mu_fin = mu2_ref[0, 1]                                                 # (K, C)

    zt = _softmax_over_k(jnp.dot(mu_prev.astype(bf16), yb,
                                 preferred_element_type=f32))              # (K, tn)
    x2 = jnp.dot(jnp.transpose(mu_fin).astype(bf16), zt.astype(bf16),
                 preferred_element_type=f32)
    x2 = jnp.maximum(x2, 0.0)

    y2 = jnp.dot(w2_ref[...], x2.astype(bf16),
                 preferred_element_type=f32) + bnb_ref[...]
    out_ref[0] = jnp.maximum(y2 + x_ref[0].astype(f32), 0.0).astype(out_ref.dtype)


# ----------------------------------------------------------------------------- wrapper

def _vmem_budget_bytes():
    """Generation-aware scoped-VMEM budget with headroom for Mosaic internal scratch."""
    try:
        cap = int(pltpu.get_tpu_info().vmem_capacity_bytes)
    except Exception:
        cap = None
    if not cap or cap <= 0:
        cap = 64 * 1024 * 1024          # assume the smallest current generation (v7x/TC)
    budget = cap * 3 // 4               # 48 MiB on v7x, 96 MiB on v5e/v6e
    return max(32 * 1024 * 1024, min(budget, 112 * 1024 * 1024))


def _fused_vmem_estimate(C, N, K, in_bytes, out_bytes):
    """Rough per-grid-step VMEM need of the fused whole-batch kernel."""
    stream = 2 * C * N * in_bytes + 2 * C * N * out_bytes        # double-buffered x / out
    weights = 2 * (C * C * 2) + 2 * C * 4 + K * C * 4
    live = C * N * (4 + 2 + 4 + 4) + K * N * 4 + 4 * K * C * 4   # y f32, yb, x2, y2, zt, mu temps
    return stream + weights + live


def _choose_tile_n(n, target):
    """Largest lane-aligned tile (multiple of 128) that divides N and is <= target."""
    if n % 128 != 0:
        return None
    top = min(int(target), n)
    for t in range(top - top % 128, 0, -128):
        if n % t == 0:
            return t
    return None


def emau_forward(x_nchw, params, *, force_tiled=None, tile_n=1024):
    B, C, H, W = x_nchw.shape
    N = H * W
    K = params["mu"].shape[-1]
    x_bcn = x_nchw.reshape(B, C, N)            # NCHW -> (B, C, N): pure reshape
    out_dtype = x_nchw.dtype                   # bf16 callers get bf16 streamed output

    w1 = params["w1"].astype(jnp.bfloat16)                                   # (C, C)
    b1 = params["b1"].reshape(C, 1).astype(jnp.float32)
    mu0 = jnp.transpose(params["mu"]).astype(jnp.float32)                    # (K, C)
    # Fold BN (eval) scale into conv2 weight rows; only the bias stays in-kernel.
    w2f = (params["w2"] * params["bn_scale"][:, None]).astype(jnp.bfloat16)  # (C, C)
    bn_b = params["bn_bias"].reshape(C, 1).astype(jnp.float32)

    budget = _vmem_budget_bytes()
    in_bytes = jnp.dtype(x_nchw.dtype).itemsize
    out_bytes = jnp.dtype(out_dtype).itemsize
    tn = _choose_tile_n(N, tile_n)
    if force_tiled is None:
        use_tiled = (tn is not None and tn < N and
                     _fused_vmem_estimate(C, N, K, in_bytes, out_bytes) > budget)
    else:
        use_tiled = bool(force_tiled) and tn is not None

    if not use_tiled:
        out_bcn, mu_kc = pl.pallas_call(
            _emau_fused_kernel,
            out_shape=(jax.ShapeDtypeStruct((B, C, N), out_dtype),
                       jax.ShapeDtypeStruct((B, K, C), jnp.float32)),
            grid=(B,),
            in_specs=[
                pl.BlockSpec((1, C, N), lambda b: (b, 0, 0)),   # x, lane-dense N
                pl.BlockSpec((C, C), lambda b: (0, 0)),          # w1 (resident)
                pl.BlockSpec((C, 1), lambda b: (0, 0)),          # b1
                pl.BlockSpec((K, C), lambda b: (0, 0)),          # mu init
                pl.BlockSpec((C, C), lambda b: (0, 0)),          # w2 * bn_scale
                pl.BlockSpec((C, 1), lambda b: (0, 0)),          # bn bias
            ],
            out_specs=(
                pl.BlockSpec((1, C, N), lambda b: (b, 0, 0)),
                pl.BlockSpec((1, K, C), lambda b: (b, 0, 0)),
            ),
            compiler_params=pltpu.CompilerParams(
                dimension_semantics=("parallel",),     # shard B over cores on v7x
                vmem_limit_bytes=budget),
        )(x_bcn, w1, b1, mu0, w2f, bn_b)
        mu_final = mu_kc
    else:
        nt = N // tn
        # Pass 1: EM statistics (resident bf16 y scratch, mu finalized on last N-tile).
        mu2 = pl.pallas_call(
            _emau_em_kernel,
            out_shape=jax.ShapeDtypeStruct((B, 2, K, C), jnp.float32),
            grid=(B, nt),
            in_specs=[
                pl.BlockSpec((1, C, tn), lambda b, t: (b, 0, t)),
                pl.BlockSpec((C, C), lambda b, t: (0, 0)),
                pl.BlockSpec((C, 1), lambda b, t: (0, 0)),
                pl.BlockSpec((K, C), lambda b, t: (0, 0)),
            ],
            out_specs=pl.BlockSpec((1, 2, K, C), lambda b, t: (b, 0, 0, 0)),
            scratch_shapes=[pltpu.VMEM((C, N), jnp.bfloat16)],
            compiler_params=pltpu.CompilerParams(
                dimension_semantics=("parallel", "arbitrary"),
                vmem_limit_bytes=budget),
        )(x_bcn, w1, b1, mu0)

        # Pass 2: output (every (b, N-tile) independent -> fully parallel, lane-dense out).
        out_bcn = pl.pallas_call(
            _emau_out_kernel,
            out_shape=jax.ShapeDtypeStruct((B, C, N), out_dtype),
            grid=(B, nt),
            in_specs=[
                pl.BlockSpec((1, C, tn), lambda b, t: (b, 0, t)),
                pl.BlockSpec((C, C), lambda b, t: (0, 0)),
                pl.BlockSpec((C, 1), lambda b, t: (0, 0)),
                pl.BlockSpec((1, 2, K, C), lambda b, t: (b, 0, 0, 0)),
                pl.BlockSpec((C, C), lambda b, t: (0, 0)),
                pl.BlockSpec((C, 1), lambda b, t: (0, 0)),
            ],
            out_specs=pl.BlockSpec((1, C, tn), lambda b, t: (b, 0, t)),
            compiler_params=pltpu.CompilerParams(
                dimension_semantics=("parallel", "parallel"),
                vmem_limit_bytes=budget),
        )(x_bcn, w1, b1, mu2, w2f, bn_b)
        mu_final = mu2[:, 1]

    out_nchw = out_bcn.reshape(B, C, H, W)
    mu_out = jnp.transpose(mu_final, (0, 2, 1))    # tiny (B, K, C) -> (B, C, K)
    return out_nchw, mu_out


# --------------------------------------------------------------------------- reference

def emau_reference(x_nchw, params, stage_num=STAGE_NUM):
    """Pure-JAX (f32) mirror of the PyTorch forward (NCHW), for verification."""
    B, C, H, W = x_nchw.shape
    N = H * W
    K = params["mu"].shape[-1]
    idn = x_nchw
    xf = x_nchw.reshape(B, C, N)
    y = jnp.einsum("oc,bcn->bon", params["w1"], xf) + params["b1"][None, :, None]
    mu = jnp.broadcast_to(params["mu"][None], (B, C, K))
    z = None
    for _ in range(stage_num):
        z = jnp.einsum("bcn,bck->bnk", y, mu)
        z = jax.nn.softmax(z, axis=2)
        z_ = z / (1e-6 + jnp.sum(z, axis=1, keepdims=True))
        mu = jnp.einsum("bcn,bnk->bck", y, z_)
        mu = mu / (1e-6 + jnp.linalg.norm(mu, axis=1, keepdims=True))
    xr = jnp.einsum("bck,bnk->bcn", mu, z)
    xr = jnp.maximum(xr, 0.0).reshape(B, C, H, W)
    y2 = jnp.einsum("oc,bchw->bohw", params["w2"], xr)
    y2 = (y2 * params["bn_scale"][None, :, None, None]
          + params["bn_bias"][None, :, None, None])
    out = jnp.maximum(y2 + idn, 0.0)
    return out, mu


def init_params(key, c, k):
    k1, k2, k3, k4 = jax.random.split(key, 4)
    # conv1: nn.Conv2d(c, c, 1) -> weight normal(0, sqrt(2/(1*1*c))), stored (out, in)
    w1 = jax.random.normal(k1, (c, c), jnp.float32) * math.sqrt(2.0 / c)
    b1 = jax.random.normal(k2, (c,), jnp.float32) * 0.01
    # mu buffer: (1, c, k) normal(0, sqrt(2/k)) then l2-normalized over c
    mu = jax.random.normal(k3, (c, k), jnp.float32) * math.sqrt(2.0 / k)
    mu = mu / (1e-6 + jnp.linalg.norm(mu, axis=0, keepdims=True))
    # conv2: nn.Conv2d(c, c, 1, bias=False)
    w2 = jax.random.normal(k4, (c, c), jnp.float32) * math.sqrt(2.0 / c)
    # SynchronizedBatchNorm2d(c): gamma=1, beta=0, running_mean=0, running_var=1 (eval)
    gamma = jnp.ones((c,), jnp.float32)
    beta = jnp.zeros((c,), jnp.float32)
    running_mean = jnp.zeros((c,), jnp.float32)
    running_var = jnp.ones((c,), jnp.float32)
    bn_scale = gamma / jnp.sqrt(running_var + BN_EPS)
    bn_bias = beta - running_mean * bn_scale
    return dict(w1=w1, b1=b1, mu=mu, w2=w2, bn_scale=bn_scale, bn_bias=bn_bias)


if __name__ == "__main__":
    B, C, H, W, K = 2, 64, 16, 16, 32
    key = jax.random.PRNGKey(0)
    kp, kx = jax.random.split(key)
    params = init_params(kp, C, K)
    x = jax.random.normal(kx, (B, C, H, W), jnp.float32)

    out_ref, mu_ref = emau_reference(x, params)
    fwd = jax.jit(emau_forward, static_argnames=("force_tiled", "tile_n"))

    # 1) Auto-selected path (fused whole-batch kernel at this small shape).
    out, mu_out = fwd(x, params)
    jax.block_until_ready((out, mu_out))
    assert out.shape == x.shape and mu_out.shape == (B, C, K)
    assert np.allclose(np.asarray(out), np.asarray(out_ref), atol=3e-2, rtol=3e-2)
    assert np.allclose(np.asarray(mu_out), np.asarray(mu_ref), atol=3e-2, rtol=3e-2)

    # 2) Force the N-tiled two-pass path (v7x / production strategy), 2 tiles of 128.
    out_t, mu_t = fwd(x, params, force_tiled=True, tile_n=128)
    jax.block_until_ready((out_t, mu_t))
    assert np.allclose(np.asarray(out_t), np.asarray(out_ref), atol=3e-2, rtol=3e-2)
    assert np.allclose(np.asarray(mu_t), np.asarray(mu_ref), atol=3e-2, rtol=3e-2)

    print("KERNEL_OK")
</pallas_src>

<mosaic_0001>
module attributes {stable_mosaic.version = 11 : i64} {
  func.func @_emau_fused_kernel(%arg0: i32, %arg1: memref<1x64x256xf32, #tpu.memory_space<vmem>>, %arg2: memref<64x64xbf16, #tpu.memory_space<vmem>>, %arg3: memref<64x1xf32, #tpu.memory_space<vmem>>, %arg4: memref<32x64xf32, #tpu.memory_space<vmem>>, %arg5: memref<64x64xbf16, #tpu.memory_space<vmem>>, %arg6: memref<64x1xf32, #tpu.memory_space<vmem>>, %arg7: memref<1x64x256xf32, #tpu.memory_space<vmem>>, %arg8: memref<1x32x64xf32, #tpu.memory_space<vmem>>) attributes {dimension_semantics = [#tpu.dimension_semantics<parallel>], iteration_bounds = array<i64: 2>, scalar_prefetch = 0 : i64, scratch_operands = 0 : i64, tpu.core_type = #tpu.core_type<tc>, window_params = [{transform_indices = @transform_0, window_bounds = array<i64: 1, 64, 256>}, {pipeline_mode = #tpu.pipeline_mode<synchronous>, transform_indices = @transform_1, window_bounds = array<i64: 64, 64>}, {pipeline_mode = #tpu.pipeline_mode<synchronous>, transform_indices = @transform_2, window_bounds = array<i64: 64, 1>}, {pipeline_mode = #tpu.pipeline_mode<synchronous>, transform_indices = @transform_3, window_bounds = array<i64: 32, 64>}, {pipeline_mode = #tpu.pipeline_mode<synchronous>, transform_indices = @transform_4, window_bounds = array<i64: 64, 64>}, {pipeline_mode = #tpu.pipeline_mode<synchronous>, transform_indices = @transform_5, window_bounds = array<i64: 64, 1>}, {transform_indices = @transform_6, window_bounds = array<i64: 1, 64, 256>}, {transform_indices = @transform_7, window_bounds = array<i64: 1, 32, 64>}]} {
    %c0 = arith.constant 0 : index
    %c0_0 = arith.constant 0 : index
    %0 = vector.load %arg2[%c0, %c0_0] : memref<64x64xbf16, #tpu.memory_space<vmem>>, vector<64x64xbf16>
    %c0_1 = arith.constant 0 : index
    %c0_2 = arith.constant 0 : index
    %c0_3 = arith.constant 0 : index
    %1 = vector.load %arg1[%c0_1, %c0_2, %c0_3] : memref<1x64x256xf32, #tpu.memory_space<vmem>>, vector<1x64x256xf32>
    %2 = vector.shape_cast %1 : vector<1x64x256xf32> to vector<64x256xf32>
    %3 = arith.truncf %2 : vector<64x256xf32> to vector<64x256xbf16>
    %cst = arith.constant dense<0.000000e+00> : vector<64x256xf32>
    %4 = tpu.matmul %0, %3, %cst {dimension_numbers = #tpu.dot_dimension_numbers<[1], [0], [0], [1], [0, 0, 1, 1], [], []>} : vector<64x64xbf16>, vector<64x256xbf16>, vector<64x256xf32> -> vector<64x256xf32>
    %c0_4 = arith.constant 0 : index
    %c0_5 = arith.constant 0 : index
    %5 = vector.load %arg3[%c0_4, %c0_5] : memref<64x1xf32, #tpu.memory_space<vmem>>, vector<64x1xf32>
    %6 = vector.broadcast %5 : vector<64x1xf32> to vector<64x256xf32>
    %7 = arith.addf %4, %6 : vector<64x256xf32>
    %8 = arith.truncf %7 : vector<64x256xf32> to vector<64x256xbf16>
    %c0_6 = arith.constant 0 : index
    %c0_7 = arith.constant 0 : index
    %9 = vector.load %arg4[%c0_6, %c0_7] : memref<32x64xf32, #tpu.memory_space<vmem>>, vector<32x64xf32>
    %10 = arith.truncf %9 : vector<32x64xf32> to vector<32x64xbf16>
    %cst_8 = arith.constant dense<0.000000e+00> : vector<32x256xf32>
    %11 = tpu.matmul %10, %8, %cst_8 {dimension_numbers = #tpu.dot_dimension_numbers<[1], [0], [0], [1], [0, 0, 1, 1], [], []>} : vector<32x64xbf16>, vector<64x256xbf16>, vector<32x256xf32> -> vector<32x256xf32>
    %cst_9 = arith.constant dense<0xFF800000> : vector<256xf32>
    %12 = vector.multi_reduction <maximumf>, %11, %cst_9 [0] : vector<32x256xf32> to vector<256xf32>
    %13 = vector.shape_cast %12 : vector<256xf32> to vector<1x256xf32>
    %14 = vector.broadcast %13 : vector<1x256xf32> to vector<32x256xf32>
    %15 = arith.subf %11, %14 : vector<32x256xf32>
    %16 = math.exp %15 : vector<32x256xf32>
    %cst_10 = arith.constant dense<0.000000e+00> : vector<256xf32>
    %17 = vector.multi_reduction <add>, %16, %cst_10 [0] : vector<32x256xf32> to vector<256xf32>
    %18 = vector.shape_cast %17 : vector<256xf32> to vector<1x256xf32>
    %19 = vector.broadcast %18 : vector<1x256xf32> to vector<32x256xf32>
    %20 = arith.divf %16, %19 : vector<32x256xf32>
    %21 = arith.truncf %20 : vector<32x256xf32> to vector<32x256xbf16>
    %cst_11 = arith.constant dense<0.000000e+00> : vector<32x64xf32>
    %22 = tpu.matmul %21, %8, %cst_11 {dimension_numbers = #tpu.dot_dimension_numbers<[1], [1], [0], [0], [0, 0, 1, 0], [], []>} : vector<32x256xbf16>, vector<64x256xbf16>, vector<32x64xf32> -> vector<32x64xf32>
    %cst_12 = arith.constant dense<0.000000e+00> : vector<32xf32>
    %23 = vector.multi_reduction <add>, %20, %cst_12 [1] : vector<32x256xf32> to vector<32xf32>
    %24 = vector.shape_cast %23 : vector<32xf32> to vector<32x1xf32>
    %cst_13 = arith.constant 9.99999997E-7 : f32
    %25 = vector.broadcast %cst_13 : f32 to vector<32x1xf32>
    %26 = arith.addf %25, %24 : vector<32x1xf32>
    %27 = vector.broadcast %26 : vector<32x1xf32> to vector<32x64xf32>
    %28 = arith.divf %22, %27 : vector<32x64xf32>
    %29 = arith.mulf %28, %28 : vector<32x64xf32>
    %cst_14 = arith.constant dense<0.000000e+00> : vector<32xf32>
    %30 = vector.multi_reduction <add>, %29, %cst_14 [1] : vector<32x64xf32> to vector<32xf32>
    %31 = vector.shape_cast %30 : vector<32xf32> to vector<32x1xf32>
    %32 = math.sqrt %31 : vector<32x1xf32>
    %cst_15 = arith.constant 9.99999997E-7 : f32
    %33 = vector.broadcast %cst_15 : f32 to vector<32x1xf32>
    %34 = arith.addf %33, %32 : vector<32x1xf32>
    %35 = vector.broadcast %34 : vector<32x1xf32> to vector<32x64xf32>
    %36 = arith.divf %28, %35 : vector<32x64xf32>
    %37 = arith.truncf %36 : vector<32x64xf32> to vector<32x64xbf16>
    %cst_16 = arith.constant dense<0.000000e+00> : vector<32x256xf32>
    %38 = tpu.matmul %37, %8, %cst_16 {dimension_numbers = #tpu.dot_dimension_numbers<[1], [0], [0], [1], [0, 0, 1, 1], [], []>} : vector<32x64xbf16>, vector<64x256xbf16>, vector<32x256xf32> -> vector<32x256xf32>
    %cst_17 = arith.constant dense<0xFF800000> : vector<256xf32>
    %39 = vector.multi_reduction <maximumf>, %38, %cst_17 [0] : vector<32x256xf32> to vector<256xf32>
    %40 = vector.shape_cast %39 : vector<256xf32> to vector<1x256xf32>
    %41 = vector.broadcast %40 : vector<1x256xf32> to vector<32x256xf32>
    %42 = arith.subf %38, %41 : vector<32x256xf32>
    %43 = math.exp %42 : vector<32x256xf32>
    %cst_18 = arith.constant dense<0.000000e+00> : vector<256xf32>
    %44 = vector.multi_reduction <add>, %43, %cst_18 [0] : vector<32x256xf32> to vector<256xf32>
    %45 = vector.shape_cast %44 : vector<256xf32> to vector<1x256xf32>
    %46 = vector.broadcast %45 : vector<1x256xf32> to vector<32x256xf32>
    %47 = arith.divf %43, %46 : vector<32x256xf32>
    %48 = arith.truncf %47 : vector<32x256xf32> to vector<32x256xbf16>
    %cst_19 = arith.constant dense<0.000000e+00> : vector<32x64xf32>
    %49 = tpu.matmul %48, %8, %cst_19 {dimension_numbers = #tpu.dot_dimension_numbers<[1], [1], [0], [0], [0, 0, 1, 0], [], []>} : vector<32x256xbf16>, vector<64x256xbf16>, vector<32x64xf32> -> vector<32x64xf32>
    %cst_20 = arith.constant dense<0.000000e+00> : vector<32xf32>
    %50 = vector.multi_reduction <add>, %47, %cst_20 [1] : vector<32x256xf32> to vector<32xf32>
    %51 = vector.shape_cast %50 : vector<32xf32> to vector<32x1xf32>
    %cst_21 = arith.constant 9.99999997E-7 : f32
    %52 = vector.broadcast %cst_21 : f32 to vector<32x1xf32>
    %53 = arith.addf %52, %51 : vector<32x1xf32>
    %54 = vector.broadcast %53 : vector<32x1xf32> to vector<32x64xf32>
    %55 = arith.divf %49, %54 : vector<32x64xf32>
    %56 = arith.mulf %55, %55 : vector<32x64xf32>
    %cst_22 = arith.constant dense<0.000000e+00> : vector<32xf32>
    %57 = vector.multi_reduction <add>, %56, %cst_22 [1] : vector<32x64xf32> to vector<32xf32>
    %58 = vector.shape_cast %57 : vector<32xf32> to vector<32x1xf32>
    %59 = math.sqrt %58 : vector<32x1xf32>
    %cst_23 = arith.constant 9.99999997E-7 : f32
    %60 = vector.broadcast %cst_23 : f32 to vector<32x1xf32>
    %61 = arith.addf %60, %59 : vector<32x1xf32>
    %62 = vector.broadcast %61 : vector<32x1xf32> to vector<32x64xf32>
    %63 = arith.divf %55, %62 : vector<32x64xf32>
    %64 = arith.truncf %63 : vector<32x64xf32> to vector<32x64xbf16>
    %cst_24 = arith.constant dense<0.000000e+00> : vector<32x256xf32>
    %65 = tpu.matmul %64, %8, %cst_24 {dimension_numbers = #tpu.dot_dimension_numbers<[1], [0], [0], [1], [0, 0, 1, 1], [], []>} : vector<32x64xbf16>, vector<64x256xbf16>, vector<32x256xf32> -> vector<32x256xf32>
    %cst_25 = arith.constant dense<0xFF800000> : vector<256xf32>
    %66 = vector.multi_reduction <maximumf>, %65, %cst_25 [0] : vector<32x256xf32> to vector<256xf32>
    %67 = vector.shape_cast %66 : vector<256xf32> to vector<1x256xf32>
    %68 = vector.broadcast %67 : vector<1x256xf32> to vector<32x256xf32>
    %69 = arith.subf %65, %68 : vector<32x256xf32>
    %70 = math.exp %69 : vector<32x256xf32>
    %cst_26 = arith.constant dense<0.000000e+00> : vector<256xf32>
    %71 = vector.multi_reduction <add>, %70, %cst_26 [0] : vector<32x256xf32> to vector<256xf32>
    %72 = vector.shape_cast %71 : vector<256xf32> to vector<1x256xf32>
    %73 = vector.broadcast %72 : vector<1x256xf32> to vector<32x256xf32>
    %74 = arith.divf %70, %73 : vector<32x256xf32>
    %75 = arith.truncf %74 : vector<32x256xf32> to vector<32x256xbf16>
    %cst_27 = arith.constant dense<0.000000e+00> : vector<32x64xf32>
    %76 = tpu.matmul %75, %8, %cst_27 {dimension_numbers = #tpu.dot_dimension_numbers<[1], [1], [0], [0], [0, 0, 1, 0], [], []>} : vector<32x256xbf16>, vector<64x256xbf16>, vector<32x64xf32> -> vector<32x64xf32>
    %cst_28 = arith.constant dense<0.000000e+00> : vector<32xf32>
    %77 = vector.multi_reduction <add>, %74, %cst_28 [1] : vector<32x256xf32> to vector<32xf32>
    %78 = vector.shape_cast %77 : vector<32xf32> to vector<32x1xf32>
    %cst_29 = arith.constant 9.99999997E-7 : f32
    %79 = vector.broadcast %cst_29 : f32 to vector<32x1xf32>
    %80 = arith.addf %79, %78 : vector<32x1xf32>
    %81 = vector.broadcast %80 : vector<32x1xf32> to vector<32x64xf32>
    %82 = arith.divf %76, %81 : vector<32x64xf32>
    %83 = arith.mulf %82, %82 : vector<32x64xf32>
    %cst_30 = arith.constant dense<0.000000e+00> : vector<32xf32>
    %84 = vector.multi_reduction <add>, %83, %cst_30 [1] : vector<32x64xf32> to vector<32xf32>
    %85 = vector.shape_cast %84 : vector<32xf32> to vector<32x1xf32>
    %86 = math.sqrt %85 : vector<32x1xf32>
    %cst_31 = arith.constant 9.99999997E-7 : f32
    %87 = vector.broadcast %cst_31 : f32 to vector<32x1xf32>
    %88 = arith.addf %87, %86 : vector<32x1xf32>
    %89 = vector.broadcast %88 : vector<32x1xf32> to vector<32x64xf32>
    %90 = arith.divf %82, %89 : vector<32x64xf32>
    %91 = tpu.transpose %90, [1, 0] : vector<32x64xf32> -> vector<64x32xf32>
    %92 = arith.truncf %91 : vector<64x32xf32> to vector<64x32xbf16>
    %93 = arith.truncf %74 : vector<32x256xf32> to vector<32x256xbf16>
    %cst_32 = arith.constant dense<0.000000e+00> : vector<64x256xf32>
    %94 = tpu.matmul %92, %93, %cst_32 {dimension_numbers = #tpu.dot_dimension_numbers<[1], [0], [0], [1], [0, 0, 1, 1], [], []>} : vector<64x32xbf16>, vector<32x256xbf16>, vector<64x256xf32> -> vector<64x256xf32>
    %cst_33 = arith.constant 0.000000e+00 : f32
    %95 = vector.broadcast %cst_33 : f32 to vector<64x256xf32>
    %96 = arith.maximumf %94, %95 : vector<64x256xf32>
    %c0_34 = arith.constant 0 : index
    %c0_35 = arith.constant 0 : index
    %97 = vector.load %arg5[%c0_34, %c0_35] : memref<64x64xbf16, #tpu.memory_space<vmem>>, vector<64x64xbf16>
    %98 = arith.truncf %96 : vector<64x256xf32> to vector<64x256xbf16>
    %cst_36 = arith.constant dense<0.000000e+00> : vector<64x256xf32>
    %99 = tpu.matmul %97, %98, %cst_36 {dimension_numbers = #tpu.dot_dimension_numbers<[1], [0], [0], [1], [0, 0, 1, 1], [], []>} : vector<64x64xbf16>, vector<64x256xbf16>, vector<64x256xf32> -> vector<64x256xf32>
    %c0_37 = arith.constant 0 : index
    %c0_38 = arith.constant 0 : index
    %100 = vector.load %arg6[%c0_37, %c0_38] : memref<64x1xf32, #tpu.memory_space<vmem>>, vector<64x1xf32>
    %101 = vector.broadcast %100 : vector<64x1xf32> to vector<64x256xf32>
    %102 = arith.addf %99, %101 : vector<64x256xf32>
    %c0_39 = arith.constant 0 : index
    %c0_40 = arith.constant 0 : index
    %c0_41 = arith.constant 0 : index
    %103 = vector.load %arg1[%c0_39, %c0_40, %c0_41] : memref<1x64x256xf32, #tpu.memory_space<vmem>>, vector<1x64x256xf32>
    %104 = vector.shape_cast %103 : vector<1x64x256xf32> to vector<64x256xf32>
    %105 = arith.addf %102, %104 : vector<64x256xf32>
    %cst_42 = arith.constant 0.000000e+00 : f32
    %106 = vector.broadcast %cst_42 : f32 to vector<64x256xf32>
    %107 = arith.maximumf %105, %106 : vector<64x256xf32>
    %c0_43 = arith.constant 0 : index
    %c0_44 = arith.constant 0 : index
    %c0_45 = arith.constant 0 : index
    %108 = vector.load %arg7[%c0_43, %c0_44, %c0_45] : memref<1x64x256xf32, #tpu.memory_space<vmem>>, vector<1x64x256xf32>
    %109 = vector.shape_cast %108 : vector<1x64x256xf32> to vector<64x256xf32>
    %110 = vector.shape_cast %107 : vector<64x256xf32> to vector<1x64x256xf32>
    tpu.vector_store %arg7[%c0_43, %c0_44, %c0_45], %110 {strides = array<i32>} : memref<1x64x256xf32, #tpu.memory_space<vmem>>, vector<1x64x256xf32>,
    %c0_46 = arith.constant 0 : index
    %c0_47 = arith.constant 0 : index
    %c0_48 = arith.constant 0 : index
    %111 = vector.load %arg8[%c0_46, %c0_47, %c0_48] : memref<1x32x64xf32, #tpu.memory_space<vmem>>, vector<1x32x64xf32>
    %112 = vector.shape_cast %111 : vector<1x32x64xf32> to vector<32x64xf32>
    %113 = vector.shape_cast %90 : vector<32x64xf32> to vector<1x32x64xf32>
    tpu.vector_store %arg8[%c0_46, %c0_47, %c0_48], %113 {strides = array<i32>} : memref<1x32x64xf32, #tpu.memory_space<vmem>>, vector<1x32x64xf32>,
    return
  }
  func.func @transform_0(%arg0: i32) -> (i32, i32, i32) {
    %c0_i32 = arith.constant 0 : i32
    %c0_i32_0 = arith.constant 0 : i32
    %c0_i32_1 = arith.constant 0 : i32
    return %arg0, %c0_i32, %c0_i32_0 : i32, i32, i32
  }
  func.func @transform_1(%arg0: i32) -> (i32, i32) {
    %c0_i32 = arith.constant 0 : i32
    %c0_i32_0 = arith.constant 0 : i32
    %c0_i32_1 = arith.constant 0 : i32
    return %c0_i32, %c0_i32_0 : i32, i32
  }
  func.func @transform_2(%arg0: i32) -> (i32, i32) {
    %c0_i32 = arith.constant 0 : i32
    %c0_i32_0 = arith.constant 0 : i32
    %c0_i32_1 = arith.constant 0 : i32
    return %c0_i32, %c0_i32_0 : i32, i32
  }
  func.func @transform_3(%arg0: i32) -> (i32, i32) {
    %c0_i32 = arith.constant 0 : i32
    %c0_i32_0 = arith.constant 0 : i32
    %c0_i32_1 = arith.constant 0 : i32
    return %c0_i32, %c0_i32_0 : i32, i32
  }
  func.func @transform_4(%arg0: i32) -> (i32, i32) {
    %c0_i32 = arith.constant 0 : i32
    %c0_i32_0 = arith.constant 0 : i32
    %c0_i32_1 = arith.constant 0 : i32
    return %c0_i32, %c0_i32_0 : i32, i32
  }
  func.func @transform_5(%arg0: i32) -> (i32, i32) {
    %c0_i32 = arith.constant 0 : i32
    %c0_i32_0 = arith.constant 0 : i32
    %c0_i32_1 = arith.constant 0 : i32
    return %c0_i32, %c0_i32_0 : i32, i32
  }
  func.func @transform_6(%arg0: i32) -> (i32, i32, i32) {
    %c0_i32 = arith.constant 0 : i32
    %c0_i32_0 = arith.constant 0 : i32
    %c0_i32_1 = arith.constant 0 : i32
    return %arg0, %c0_i32, %c0_i32_0 : i32, i32, i32
  }
  func.func @transform_7(%arg0: i32) -> (i32, i32, i32) {
    %c0_i32 = arith.constant 0 : i32
    %c0_i32_0 = arith.constant 0 : i32
    %c0_i32_1 = arith.constant 0 : i32
    return %arg0, %c0_i32, %c0_i32_0 : i32, i32, i32
  }
}

</mosaic_0001>

<llo_original>
// kernel: emau_forward.1
$region0: #{emau_forward.1}
  #allocation0 [shape = 'u32[]', space=smem, size = 0x4, offset = 0x4, fixed_abs, tag = 'smem constant byte address 0x4 - core index']
  #allocation1 [shape = 'u32[144,128]{1,0:T(1,128)}', space=vmem, size = 0x12000, scoped, tag = 'internal scratch']
  %s0 = inlined_call_operand.vmem [shape: f32[2,64,256], index: 0, kind: input, shape index: {}]
  %s1 = inlined_call_operand.vmem [shape: bf16[64,64], index: 1, kind: input, shape index: {}]
  %s2 = inlined_call_operand.vmem [shape: f32[64,1], index: 2, kind: input, shape index: {}]
  %s3 = inlined_call_operand.vmem [shape: f32[32,64], index: 3, kind: input, shape index: {}]
  %s4 = inlined_call_operand.vmem [shape: bf16[64,64], index: 4, kind: input, shape index: {}]
  %s5 = inlined_call_operand.vmem [shape: f32[64,1], index: 5, kind: input, shape index: {}]
  %s6 = inlined_call_operand.vmem [shape: f32[2,64,256], index: 6, kind: output, shape index: {0}]
  %s7 = inlined_call_operand.hbm [shape: f32[2,32,64], index: 7, kind: output, shape index: {1}]
  %8 = xla_tuple %s6, %s7
  %s9 = sld [smem:[#allocation0]]
  $region65: #{emau_forward.1} parent=0
    _
  %s11 = ssub.s32 1, %s9
  %s12 = scalar_select 0, %s11, %s9
  $region1: #{emau_forward.1} parent=0
    #allocation2 [shape = 'u8[32768]{0}', space=vmem, size = 0x8000, scoped, tag = 'output window, operand 1']
    #allocation3 [shape = 's32[2]{0}', space=sflag, size = 0x8, scoped, tag = 'scoped memory for emau_forward.1']
    %13 = vsyncpa [#allocation3], 0
    %s14 = scalar_lea.sflag [#allocation3], 1
    %15 = vsyncpa %s14, 0
    loop: start=0, step=1, limit=4
    $region2: #{emau_forward.1} parent=1 // loop_pre_header
      _
    $region3: #{emau_forward.1} parent=1 // loop_header
      %s17 = sphi 0, %s21
      %p18 = scmp.ge.s32.totalorder %s17, 4
      %s27 = sphi 0, %s29
      %s30 = sphi 0, %s27
      %s31 = sphi 0, %s30
      %s47 = sphi 0, %s31
      %s51 = sphi 0, %s51
      %s53 = sphi 0, %s51
      %s54 = sphi 0, %s53
      %s68 = sphi 0, %s54
      %s72 = sphi 0, %s72
      %s74 = sphi 0, %s72
      %s75 = sphi 0, %s74
      %s89 = sphi 0, %s75
      %s93 = sphi 0, %s93
      %s95 = sphi 0, %s93
      %s96 = sphi 0, %s95
      %s110 = sphi 0, %s96
      %s114 = sphi 0, %s114
      %s116 = sphi 0, %s114
      %s117 = sphi 0, %s116
      %s131 = sphi 0, %s117
      %s135 = sphi 0, %s135
      %s137 = sphi 0, %s135
      %s138 = sphi 0, %s137
      %s152 = sphi 0, %s138
      %s158 = sphi 0, %s160
      %s161 = sphi 0, %s158
      %s162 = sphi 0, %s161
      %s178 = sphi 0, %s162
      %s184 = sphi 0, %s186
      %s187 = sphi 0, %s184
      %s188 = sphi 0, %s187
      %s204 = sphi 0, %s188
    $region4: #{emau_forward.1} parent=1 // loop_header_branch
      %20 = sbr.rel (%p18) target = $region8
    $region5: #{emau_forward.1} parent=1 // loop_body
      %s22 = ssub.s32 %s17, 1
      %s23 = ssub.s32 %s17, 2
      %s24 = sadd.s32 %s17, 1
      %s25 = ssub.s32 %s17, %s24
      %p26 = scmp.eq.s32.totalorder %s25, 0
      %s28 = sadd.s32 %s27, 1
      %s29 = scalar_select %p26, %s27, %s28
      %p32 = pneg %p26
      %p33 = scmp.eq.s32.totalorder %s17, 1
      %p34 = por %p32, %p33
      %p35 = scmp.ne.s32.totalorder %s27, %s30
      %p36 = scmp.eq.s32.totalorder %s17, 0
      %p37 = por %p35, %p36
      %p38 = scmp.ne.s32.totalorder %s27, %s30
      %p39 = scmp.eq.s32.totalorder %s22, 1
      %p40 = por %p38, %p39
      %p41 = scmp.ne.s32.totalorder %s30, %s31
      %p42 = scmp.eq.s32.totalorder %s22, 0
      %p43 = por %p41, %p42
      %p44 = scmp.ne.s32.totalorder %s30, %s31
      %p45 = scmp.eq.s32.totalorder %s23, 1
      %p46 = por %p44, %p45
      %p48 = scmp.ne.s32.totalorder %s31, %s47
      %p49 = scmp.eq.s32.totalorder %s23, 0
      %p50 = por %p48, %p49
      %s52 = sadd.s32 %s51, 1
      %p55 = scmp.eq.s32.totalorder %s17, 1
      %p56 = scmp.ne.s32.totalorder %s51, %s53
      %p57 = scmp.eq.s32.totalorder %s17, 0
      %p58 = por %p56, %p57
      %p59 = scmp.ne.s32.totalorder %s51, %s53
      %p60 = scmp.eq.s32.totalorder %s22, 1
      %p61 = por %p59, %p60
      %p62 = scmp.ne.s32.totalorder %s53, %s54
      %p63 = scmp.eq.s32.totalorder %s22, 0
      %p64 = por %p62, %p63
      %p65 = scmp.ne.s32.totalorder %s53, %s54
      %p66 = scmp.eq.s32.totalorder %s23, 1
      %p67 = por %p65, %p66
      %p69 = scmp.ne.s32.totalorder %s54, %s68
      %p70 = scmp.eq.s32.totalorder %s23, 0
      %p71 = por %p69, %p70
      %s73 = sadd.s32 %s72, 1
      %p76 = scmp.eq.s32.totalorder %s17, 1
      %p77 = scmp.ne.s32.totalorder %s72, %s74
      %p78 = scmp.eq.s32.totalorder %s17, 0
      %p79 = por %p77, %p78
      %p80 = scmp.ne.s32.totalorder %s72, %s74
      %p81 = scmp.eq.s32.totalorder %s22, 1
      %p82 = por %p80, %p81
      %p83 = scmp.ne.s32.totalorder %s74, %s75
      %p84 = scmp.eq.s32.totalorder %s22, 0
      %p85 = por %p83, %p84
      %p86 = scmp.ne.s32.totalorder %s74, %s75
      %p87 = scmp.eq.s32.totalorder %s23, 1
      %p88 = por %p86, %p87
      %p90 = scmp.ne.s32.totalorder %s75, %s89
      %p91 = scmp.eq.s32.totalorder %s23, 0
      %p92 = por %p90, %p91
      %s94 = sadd.s32 %s93, 1
      %p97 = scmp.eq.s32.totalorder %s17, 1
      %p98 = scmp.ne.s32.totalorder %s93, %s95
      %p99 = scmp.eq.s32.totalorder %s17, 0
      %p100 = por %p98, %p99
      %p101 = scmp.ne.s32.totalorder %s93, %s95
      %p102 = scmp.eq.s32.totalorder %s22, 1
      %p103 = por %p101, %p102
      %p104 = scmp.ne.s32.totalorder %s95, %s96
      %p105 = scmp.eq.s32.totalorder %s22, 0
      %p106 = por %p104, %p105
      %p107 = scmp.ne.s32.totalorder %s95, %s96
      %p108 = scmp.eq.s32.totalorder %s23, 1
      %p109 = por %p107, %p108
      %p111 = scmp.ne.s32.totalorder %s96, %s110
      %p112 = scmp.eq.s32.totalorder %s23, 0
      %p113 = por %p111, %p112
      %s115 = sadd.s32 %s114, 1
      %p118 = scmp.eq.s32.totalorder %s17, 1
      %p119 = scmp.ne.s32.totalorder %s114, %s116
      %p120 = scmp.eq.s32.totalorder %s17, 0
      %p121 = por %p119, %p120
      %p122 = scmp.ne.s32.totalorder %s114, %s116
      %p123 = scmp.eq.s32.totalorder %s22, 1
      %p124 = por %p122, %p123
      %p125 = scmp.ne.s32.totalorder %s116, %s117
      %p126 = scmp.eq.s32.totalorder %s22, 0
      %p127 = por %p125, %p126
      %p128 = scmp.ne.s32.totalorder %s116, %s117
      %p129 = scmp.eq.s32.totalorder %s23, 1
      %p130 = por %p128, %p129
      %p132 = scmp.ne.s32.totalorder %s117, %s131
      %p133 = scmp.eq.s32.totalorder %s23, 0
      %p134 = por %p132, %p133
      %s136 = sadd.s32 %s135, 1
      %p139 = scmp.eq.s32.totalorder %s17, 1
      %p140 = scmp.ne.s32.totalorder %s135, %s137
      %p141 = scmp.eq.s32.totalorder %s17, 0
      %p142 = por %p140, %p141
      %p143 = scmp.ne.s32.totalorder %s135, %s137
      %p144 = scmp.eq.s32.totalorder %s22, 1
      %p145 = por %p143, %p144
      %p146 = scmp.ne.s32.totalorder %s137, %s138
      %p147 = scmp.eq.s32.totalorder %s22, 0
      %p148 = por %p146, %p147
      %p149 = scmp.ne.s32.totalorder %s137, %s138
      %p150 = scmp.eq.s32.totalorder %s23, 1
      %p151 = por %p149, %p150
      %p153 = scmp.ne.s32.totalorder %s138, %s152
      %p154 = scmp.eq.s32.totalorder %s23, 0
      %p155 = por %p153, %p154
      %s156 = ssub.s32 %s17, %s24
      %p157 = scmp.eq.s32.totalorder %s156, 0
      %s159 = sadd.s32 %s158, 1
      %s160 = scalar_select %p157, %s158, %s159
      %p163 = pneg %p157
      %p164 = scmp.eq.s32.totalorder %s17, 1
      %p165 = por %p163, %p164
      %p166 = scmp.ne.s32.totalorder %s158, %s161
      %p167 = scmp.eq.s32.totalorder %s17, 0
      %p168 = por %p166, %p167
      %p169 = scmp.ne.s32.totalorder %s158, %s161
      %p170 = scmp.eq.s32.totalorder %s22, 1
      %p171 = por %p169, %p170
      %p172 = scmp.ne.s32.totalorder %s161, %s162
      %p173 = scmp.eq.s32.totalorder %s22, 0
      %p174 = por %p172, %p173
      %p175 = scmp.ne.s32.totalorder %s161, %s162
      %p176 = scmp.eq.s32.totalorder %s23, 1
      %p177 = por %p175, %p176
      %p179 = scmp.ne.s32.totalorder %s162, %s178
      %p180 = scmp.eq.s32.totalorder %s23, 0
      %p181 = por %p179, %p180
      %s182 = ssub.s32 %s17, %s24
      %p183 = scmp.eq.s32.totalorder %s182, 0
      %s185 = sadd.s32 %s184, 1
      %s186 = scalar_select %p183, %s184, %s185
      %p189 = pneg %p183
      %p190 = scmp.eq.s32.totalorder %s17, 1
      %p191 = por %p189, %p190
      %p192 = scmp.ne.s32.totalorder %s184, %s187
      %p193 = scmp.eq.s32.totalorder %s17, 0
      %p194 = por %p192, %p193
      %p195 = scmp.ne.s32.totalorder %s184, %s187
      %p196 = scmp.eq.s32.totalorder %s22, 1
      %p197 = por %p195, %p196
      %p198 = scmp.ne.s32.totalorder %s187, %s188
      %p199 = scmp.eq.s32.totalorder %s22, 0
      %p200 = por %p198, %p199
      %p201 = scmp.ne.s32.totalorder %s187, %s188
      %p202 = scmp.eq.s32.totalorder %s23, 1
      %p203 = por %p201, %p202
      %p205 = scmp.ne.s32.totalorder %s188, %s204
      %p206 = scmp.eq.s32.totalorder %s23, 0
      %p207 = por %p205, %p206
      %p208 = scmp.le.s32.totalorder 1, %s17
      %p209 = scmp.lt.s32.totalorder %s17, 3
      %p210 = pnand %p208, %p209
      %p211 = pneg %p210
      // Predicated region
      $region9: #{emau_forward.1} parent=5 // pred_check
        _
      $region10: #{emau_forward.1} parent=5 // pred_check_branch
        %213 = sbr.rel (%p210) target = $region12
      $region11: #{emau_forward.1} parent=5 // pred_region
        %s214 = ssub.s32 %s17, 1
        // Predicated region
        $region13: #{emau_forward.1} parent=11 // pred_check
          %p215 = pneg %p64
        $region14: #{emau_forward.1} parent=11 // pred_check_branch
          %217 = sbr.rel (%p215) target = $region16
        $region15: #{emau_forward.1} parent=11 // pred_region
          _
        $region16: #{emau_forward.1} parent=11 // pred_fallthru
          _
        // Predicated region
        $region17: #{emau_forward.1} parent=11 // pred_check
          %p218 = pneg %p85
        $region18: #{emau_forward.1} parent=11 // pred_check_branch
          %220 = sbr.rel (%p218) target = $region20
        $region19: #{emau_forward.1} parent=11 // pred_region
          _
        $region20: #{emau_forward.1} parent=11 // pred_fallthru
          _
        // Predicated region
        $region21: #{emau_forward.1} parent=11 // pred_check
          %p221 = pneg %p106
        $region22: #{emau_forward.1} parent=11 // pred_check_branch
          %223 = sbr.rel (%p221) target = $region24
        $region23: #{emau_forward.1} parent=11 // pred_region
          _
        $region24: #{emau_forward.1} parent=11 // pred_fallthru
          _
        // Predicated region
        $region25: #{emau_forward.1} parent=11 // pred_check
          %p224 = pneg %p127
        $region26: #{emau_forward.1} parent=11 // pred_check_branch
          %226 = sbr.rel (%p224) target = $region28
        $region27: #{emau_forward.1} parent=11 // pred_region
          _
        $region28: #{emau_forward.1} parent=11 // pred_fallthru
          _
        // Predicated region
        $region29: #{emau_forward.1} parent=11 // pred_check
          %p227 = pneg %p148
        $region30: #{emau_forward.1} parent=11 // pred_check_branch
          %229 = sbr.rel (%p227) target = $region32
        $region31: #{emau_forward.1} parent=11 // pred_region
          _
        $region32: #{emau_forward.1} parent=11 // pred_fallthru
          _
      $region12: #{emau_forward.1} parent=5 // pred_fallthru
        _
      %p230 = scmp.lt.s32.totalorder %s17, 2
      // Predicated region
      $region33: #{emau_forward.1} parent=5 // pred_check
        %p231 = pneg %p230
      $region34: #{emau_forward.1} parent=5 // pred_check_branch
        %233 = sbr.rel (%p231) target = $region36
      $region35: #{emau_forward.1} parent=5 // pred_region
        // Predicated region
        $region37: #{emau_forward.1} parent=35 // pred_check
          %p234 = pneg %p37
        $region38: #{emau_forward.1} parent=35 // pred_check_branch
          %236 = sbr.rel (%p234) target = $region40
        $region39: #{emau_forward.1} parent=35 // pred_region
          %p237 = scmp.lt.s32.totalorder %s17, 1
          %s238 = scalar_select %p237, %s17, 1
          %s239 = smul.addr %s238, 16
          %s240 = smul.addr %s239, 8
          %s241 = scalar_lea.vmem %s0, %s240
        $region40: #{emau_forward.1} parent=35 // pred_fallthru
          _
      $region36: #{emau_forward.1} parent=5 // pred_fallthru
        _
      %p242 = scmp.le.s32.totalorder 1, %s17
      %p243 = scmp.lt.s32.totalorder %s17, 3
      %p244 = pnand %p242, %p243
      %p245 = pneg %p244
      // Predicated region
      $region41: #{emau_forward.1} parent=5 // pred_check
        _
      $region42: #{emau_forward.1} parent=5 // pred_check_branch
        %247 = sbr.rel (%p244) target = $region44
      $region43: #{emau_forward.1} parent=5 // pred_region
        %s248 = ssub.s32 %s17, 1
        %p249 = scmp.lt.s32.totalorder %s22, 1
        %s250 = scalar_select %p249, %s22, 1
        %s251 = smul.addr %s250, 16
        %s252 = smul.addr %s251, 8
        %s253 = scalar_lea.vmem %s0, %s252
        %p254 = pneg %p43
        %p255 = pneg %p40
        %p256 = pneg %p64
        %p257 = pneg %p61
        %p258 = pneg %p85
        %p259 = pneg %p82
        %p260 = pneg %p106
        %p261 = pneg %p103
        %p262 = pneg %p127
        %p263 = pneg %p124
        %p264 = pneg %p148
        %p265 = pneg %p145
        %p266 = pneg %p174
        %p267 = pneg %p171
        %p268 = scmp.lt.s32.totalorder %s22, 1
        %s269 = scalar_select %p268, %s22, 1
        %s270 = smul.addr %s269, 16
        %s271 = smul.addr %s270, 8
        %s272 = scalar_lea.vmem %s6, %s271
        %p273 = pneg %p200
        %p274 = pneg %p197
        %s275 = sand.u32 %s187, 1
        %s276 = scalar_lea.sflag [#allocation3], %s275
        %s277 = sand.u32 %s187, 1
        %s278 = smul.addr %s277, 32
        %s279 = scalar_lea.vmem [#allocation2], %s278
        %p280 = scmp.lt.s32.totalorder %s22, 1
        %s281 = scalar_select %p280, %s22, 1
        %s282 = smul.addr %s281, 16
        %s283 = smul.addr %s282, 8
        %s284 = scalar_lea.vmem %s0, %s283
        %p285 = scmp.lt.s32.totalorder %s22, 1
        %s286 = scalar_select %p285, %s22, 1
        %s287 = smul.addr %s286, 16
        %s288 = smul.addr %s287, 8
        %s289 = scalar_lea.vmem %s6, %s288
        %v291 = vld [vmem:[%s1] sm:$0xf]
        %v292 = vld [vmem:[%s1 + $0x4] sm:$0xf]
        %v293 = vld [vmem:[%s1 + $0x8] sm:$0xf]
        %v294 = vld [vmem:[%s1 + $0xc] sm:$0xf]
        %v295 = vld [vmem:[%s1 + $0x10] sm:$0xf]
        %v296 = vld [vmem:[%s1 + $0x14] sm:$0xf]
        %v297 = vld [vmem:[%s1 + $0x18] sm:$0xf]
        %v298 = vld [vmem:[%s1 + $0x1c] sm:$0xf]
        %v299 = vld [vmem:[%s284] sm:$0xff]
        %v300 = vld [vmem:[%s284 + $0x8] sm:$0xff]
        %v301 = vld [vmem:[%s284 + $0x10] sm:$0xff]
        %v302 = vld [vmem:[%s284 + $0x18] sm:$0xff]
        %v303 = vld [vmem:[%s284 + $0x20] sm:$0xff]
        %v304 = vld [vmem:[%s284 + $0x28] sm:$0xff]
        %v305 = vld [vmem:[%s284 + $0x30] sm:$0xff]
        %v306 = vld [vmem:[%s284 + $0x38] sm:$0xff]
        %v307 = vld [vmem:[%s284 + $0x40] sm:$0xff]
        %v308 = vld [vmem:[%s284 + $0x48] sm:$0xff]
        %v309 = vld [vmem:[%s284 + $0x50] sm:$0xff]
        %v310 = vld [vmem:[%s284 + $0x58] sm:$0xff]
        %v311 = vld [vmem:[%s284 + $0x60] sm:$0xff]
        %v312 = vld [vmem:[%s284 + $0x68] sm:$0xff]
        %v313 = vld [vmem:[%s284 + $0x70] sm:$0xff]
        %v314 = vld [vmem:[%s284 + $0x78] sm:$0xff]
        %v315 = vpack.c.bf16 %v301, %v299
        %v316 = vpack.c.bf16 %v302, %v300
        %v317 = vpack.c.bf16 %v305, %v303
        %v318 = vpack.c.bf16 %v306, %v304
        %v319 = vpack.c.bf16 %v309, %v307
        %v320 = vpack.c.bf16 %v310, %v308
        %v321 = vpack.c.bf16 %v313, %v311
        %v322 = vpack.c.bf16 %v314, %v312
        %v323 = vld [vmem:[%s2] sm:$0xff]
        %v324 = vld [vmem:[%s2 + $0x8] sm:$0xff]
        %v325 = vld [vmem:[%s2 + $0x10] sm:$0xff]
        %v326 = vld [vmem:[%s2 + $0x18] sm:$0xff]
        %v327 = vld [vmem:[%s2 + $0x20] sm:$0xff]
        %v328 = vld [vmem:[%s2 + $0x28] sm:$0xff]
        %v329 = vld [vmem:[%s2 + $0x30] sm:$0xff]
        %v330 = vld [vmem:[%s2 + $0x38] sm:$0xff]
        %332 = vset.pattern.permute.xlu0 0
        %333 = vperm.xlu0 %332, %v323
        %v334 = vpop.permute.xlu0 %333
        %337 = vset.pattern.permute.xlu0 0
        %338 = vperm.xlu0 %337, %v324
        %v339 = vpop.permute.xlu0 %338
        %342 = vset.pattern.permute.xlu0 0
        %343 = vperm.xlu0 %342, %v325
        %v344 = vpop.permute.xlu0 %343
        %347 = vset.pattern.permute.xlu0 0
        %348 = vperm.xlu0 %347, %v326
        %v349 = vpop.permute.xlu0 %348
        %352 = vset.pattern.permute.xlu0 0
        %353 = vperm.xlu0 %352, %v327
        %v354 = vpop.permute.xlu0 %353
        %357 = vset.pattern.permute.xlu0 0
        %358 = vperm.xlu0 %357, %v328
        %v359 = vpop.permute.xlu0 %358
        %362 = vset.pattern.permute.xlu0 0
        %363 = vperm.xlu0 %362, %v329
        %v364 = vpop.permute.xlu0 %363
        %367 = vset.pattern.permute.xlu0 0
        %368 = vperm.xlu0 %367, %v330
        %v369 = vpop.permute.xlu0 %368
        %v379 = vunpack.c.l.b16 %v291
        %v380 = vunpack.c.l.b16 %v292
        %v381 = vunpack.c.l.b16 %v293
        %v382 = vunpack.c.l.b16 %v294
        %v383 = vunpack.c.l.b16 %v295
        %v384 = vunpack.c.l.b16 %v296
        %v385 = vunpack.c.l.b16 %v297
        %v386 = vunpack.c.l.b16 %v298
        %v387 = vpack.c.b16 %v380, %v379
        %v388 = vpack.c.b16 %v382, %v381
        %v389 = vpack.c.b16 %v384, %v383
        %v390 = vpack.c.b16 %v386, %v385
        %vm391 = vcmask 523264
        %v393 = vsel %vm391, %v387, 0
        %v396 = vsel %vm391, %v388, 0
        %v399 = vsel %vm391, %v389, 0
        %v402 = vsel %vm391, %v390, 0
        %404 = vmatprep.subr.bf16.mxu0 0
        %405 = vmatpush1.bf16.msra.mxu0 0
        %406 = vmatprep.subr.bf16.mxu0 0
        %407 = vmatpush1.bf16.msra.mxu0 0
        %408 = vmatprep.subr.bf16.mxu0 0
        %409 = vmatpush1.bf16.msra.mxu0 0
        %410 = vmatprep.subr.bf16.mxu0 0
        %411 = vmatpush1.bf16.msra.mxu0 0
        %412 = vmatprep.subr.bf16.mxu0 %v322
        %413 = vmatpush1.bf16.msra.mxu0 %v321
        %414 = vmatprep.subr.bf16.mxu0 %v320
        %415 = vmatpush1.bf16.msra.mxu0 %v319
        %416 = vmatprep.subr.bf16.mxu0 %v318
        %417 = vmatpush1.bf16.msra.mxu0 %v317
        %418 = vmatprep.subr.bf16.mxu0 %v316
        %419 = vmatpush1.bf16.msra.mxu0 %v315
        %420 = vmatprep.subr.bf16.mxu0 0
        %421 = vmatpush2.bf16.msra.mxu0 0
        %422 = vmatprep.subr.bf16.mxu0 0
        %423 = vmatpush2.bf16.msra.mxu0 0
        %424 = vmatprep.subr.bf16.mxu0 0
        %425 = vmatpush2.bf16.msra.mxu0 0
        %426 = vmatprep.subr.bf16.mxu0 0
        %427 = vmatpush2.bf16.msra.mxu0 0
        %428 = vmatprep.subr.bf16.mxu0 0
        %429 = vmatpush2.bf16.msra.mxu0 0
        %430 = vmatprep.subr.bf16.mxu0 0
        %431 = vmatpush2.bf16.msra.mxu0 0
        %432 = vmatprep.subr.bf16.mxu0 0
        %433 = vmatpush2.bf16.msra.mxu0 0
        %434 = vmatprep.subr.bf16.mxu0 0
        %435 = vmatpush2.bf16.msra.mxu0 0
        %436 = vmatprep.mubr.bf16.mxu0 0
        %437 = vmatmul.mubr.bf16.gmra.mxu0 %v393
        %v438 = vpop.f32.mrf.mxu0
        %v439 = vadd.f32 %v334, %v438
        %v440 = vpop.f32.mrf.mxu0
        %v441 = vadd.f32 %v334, %v440
        %v442 = vpop.f32.mrf.mxu0
        %v443 = vadd.f32 %v339, %v442
        %v444 = vpop.f32.mrf.mxu0
        %v445 = vadd.f32 %v339, %v444
        %446 = vmatprep.mubr.bf16.mxu0 0
        %447 = vmatmul.mubr.bf16.gmra.mxu0 %v396
        %v448 = vpop.f32.mrf.mxu0
        %v449 = vadd.f32 %v344, %v448
        %v450 = vpop.f32.mrf.mxu0
        %v451 = vadd.f32 %v344, %v450
        %v452 = vpop.f32.mrf.mxu0
        %v453 = vadd.f32 %v349, %v452
        %v454 = vpop.f32.mrf.mxu0
        %v455 = vadd.f32 %v349, %v454
        %456 = vmatprep.mubr.bf16.mxu0 0
        %457 = vmatmul.mubr.bf16.gmra.mxu0 %v399
        %v458 = vpop.f32.mrf.mxu0
        %v459 = vadd.f32 %v354, %v458
        %v460 = vpop.f32.mrf.mxu0
        %v461 = vadd.f32 %v354, %v460
        %v462 = vpop.f32.mrf.mxu0
        %v463 = vadd.f32 %v359, %v462
        %v464 = vpop.f32.mrf.mxu0
        %v465 = vadd.f32 %v359, %v464
        %466 = vmatprep.mubr.bf16.mxu0 0
        %467 = vmatmul.mubr.bf16.gmra.mxu0 %v402
        %v468 = vpop.f32.mrf.mxu0
        %v469 = vadd.f32 %v364, %v468
        %v470 = vpop.f32.mrf.mxu0
        %v471 = vadd.f32 %v364, %v470
        %v472 = vpop.f32.mrf.mxu0
        %v473 = vadd.f32 %v369, %v472
        %v474 = vpop.f32.mrf.mxu0
        %v475 = vadd.f32 %v369, %v474
        %476 = vdwg.mxu0
        %v477 = vpack.c.bf16 %v443, %v439
        %v478 = vpack.c.bf16 %v445, %v441
        %v479 = vpack.c.bf16 %v453, %v449
        %v480 = vpack.c.bf16 %v455, %v451
        %v481 = vpack.c.bf16 %v463, %v459
        %v482 = vpack.c.bf16 %v465, %v461
        %v483 = vpack.c.bf16 %v473, %v469
        %v484 = vpack.c.bf16 %v475, %v471
        %v485 = vld [vmem:[%s3] sm:$0xff]
        %v486 = vld [vmem:[%s3 + $0x8] sm:$0xff]
        %v487 = vld [vmem:[%s3 + $0x10] sm:$0xff]
        %v488 = vld [vmem:[%s3 + $0x18] sm:$0xff]
        %v489 = vpack.c.bf16 %v486, %v485
        %v490 = vpack.c.bf16 %v488, %v487
        %v492 = vsel %vm391, %v489, 0
        %v495 = vsel %vm391, %v490, 0
        %497 = vmatprep.subr.bf16.mxu0 0
        %498 = vmatpush1.bf16.msra.mxu0 0
        %499 = vmatprep.subr.bf16.mxu0 0
        %500 = vmatpush1.bf16.msra.mxu0 0
        %501 = vmatprep.subr.bf16.mxu0 0
        %502 = vmatpush1.bf16.msra.mxu0 0
        %503 = vmatprep.subr.bf16.mxu0 0
        %504 = vmatpush1.bf16.msra.mxu0 0
        %505 = vmatprep.subr.bf16.mxu0 %v484
        %506 = vmatpush1.bf16.msra.mxu0 %v483
        %507 = vmatprep.subr.bf16.mxu0 %v482
        %508 = vmatpush1.bf16.msra.mxu0 %v481
        %509 = vmatprep.subr.bf16.mxu0 %v480
        %510 = vmatpush1.bf16.msra.mxu0 %v479
        %511 = vmatprep.subr.bf16.mxu0 %v478
        %512 = vmatpush1.bf16.msra.mxu0 %v477
        %513 = vmatprep.subr.bf16.mxu0 0
        %514 = vmatpush2.bf16.msra.mxu0 0
        %515 = vmatprep.subr.bf16.mxu0 0
        %516 = vmatpush2.bf16.msra.mxu0 0
        %517 = vmatprep.subr.bf16.mxu0 0
        %518 = vmatpush2.bf16.msra.mxu0 0
        %519 = vmatprep.subr.bf16.mxu0 0
        %520 = vmatpush2.bf16.msra.mxu0 0
        %521 = vmatprep.subr.bf16.mxu0 0
        %522 = vmatpush2.bf16.msra.mxu0 0
        %523 = vmatprep.subr.bf16.mxu0 0
        %524 = vmatpush2.bf16.msra.mxu0 0
        %525 = vmatprep.subr.bf16.mxu0 0
        %526 = vmatpush2.bf16.msra.mxu0 0
        %527 = vmatprep.subr.bf16.mxu0 0
        %528 = vmatpush2.bf16.msra.mxu0 0
        %529 = vmatprep.mubr.bf16.mxu0 0
        %530 = vmatmul.mubr.bf16.gmra.mxu0 %v492
        %v531 = vpop.f32.mrf.mxu0
        %v532 = vadd.f32 0.0, %v531
        %v533 = vpop.f32.mrf.mxu0
        %v534 = vadd.f32 0.0, %v533
        %v535 = vpop.f32.mrf.mxu0
        %v536 = vadd.f32 0.0, %v535
        %v537 = vpop.f32.mrf.mxu0
        %v538 = vadd.f32 0.0, %v537
        %539 = vmatprep.mubr.bf16.mxu0 0
        %540 = vmatmul.mubr.bf16.gmra.mxu0 %v495
        %v541 = vpop.f32.mrf.mxu0
        %v542 = vadd.f32 0.0, %v541
        %v543 = vpop.f32.mrf.mxu0
        %v544 = vadd.f32 0.0, %v543
        %v545 = vpop.f32.mrf.mxu0
        %v546 = vadd.f32 0.0, %v545
        %v547 = vpop.f32.mrf.mxu0
        %v548 = vadd.f32 0.0, %v547
        %549 = vdwg.mxu0
        %v550 = vmax.f32 %v532, %v542
        %v551 = vmax.f32 %v536, %v546
        %v552 = vmax.f32 %v550, %v551
        %v553 = vrot.slane %v552, 4
        %v554 = vmax.f32 %v552, %v553
        %v555 = vrot.slane %v554, 2
        %v556 = vmax.f32 %v554, %v555
        %v557 = vrot.slane %v556, 1
        %v558 = vmax.f32 %v556, %v557
        %v559 = vmax.f32 %v534, %v544
        %v560 = vmax.f32 %v538, %v548
        %v561 = vmax.f32 %v559, %v560
        %v562 = vrot.slane %v561, 4
        %v563 = vmax.f32 %v561, %v562
        %v564 = vrot.slane %v563, 2
        %v565 = vmax.f32 %v563, %v564
        %v566 = vrot.slane %v565, 1
        %v567 = vmax.f32 %v565, %v566
        %v568 = vsub.f32 %v532, %v558
        %v569 = vsub.f32 %v534, %v567
        %v570 = vsub.f32 %v536, %v558
        %v571 = vsub.f32 %v538, %v567
        %v572 = vsub.f32 %v542, %v558
        %v573 = vsub.f32 %v544, %v567
        %v574 = vsub.f32 %v546, %v558
        %v575 = vsub.f32 %v548, %v567
        %v576 = vmul.f32 %v568, 1.442695
        %v577 = vpow.pop %v576
        %v578 = vmul.f32 %v569, 1.442695
        %v579 = vpow.pop %v578
        %v580 = vmul.f32 %v570, 1.442695
        %v581 = vpow.pop %v580
        %v582 = vmul.f32 %v571, 1.442695
        %v583 = vpow.pop %v582
        %v584 = vmul.f32 %v572, 1.442695
        %v585 = vpow.pop %v584
        %v586 = vmul.f32 %v573, 1.442695
        %v587 = vpow.pop %v586
        %v588 = vmul.f32 %v574, 1.442695
        %v589 = vpow.pop %v588
        %v590 = vmul.f32 %v575, 1.442695
        %v591 = vpow.pop %v590
        %v592 = vadd.f32 %v577, %v581
        %v593 = vadd.f32 %v592, %v585
        %v594 = vadd.f32 %v593, %v589
        %v595 = vrot.slane %v594, 4
        %v596 = vadd.f32 %v594, %v595
        %v597 = vrot.slane %v596, 2
        %v598 = vadd.f32 %v596, %v597
        %v599 = vrot.slane %v598, 1
        %v600 = vadd.f32 %v598, %v599
        %v601 = vadd.f32 %v579, %v583
        %v602 = vadd.f32 %v601, %v587
        %v603 = vadd.f32 %v602, %v591
        %v604 = vrot.slane %v603, 4
        %v605 = vadd.f32 %v603, %v604
        %v606 = vrot.slane %v605, 2
        %v607 = vadd.f32 %v605, %v606
        %v608 = vrot.slane %v607, 1
        %v609 = vadd.f32 %v607, %v608
        %v610 = vrcp.pop %v600
        %v611 = vmul.f32 %v577, %v610
        %v612 = vrcp.pop %v609
        %v613 = vmul.f32 %v579, %v612
        %v614 = vmul.f32 %v581, %v610
        %v615 = vmul.f32 %v583, %v612
        %v616 = vmul.f32 %v585, %v610
        %v617 = vmul.f32 %v587, %v612
        %v618 = vmul.f32 %v589, %v610
        %v619 = vmul.f32 %v591, %v612
        %v620 = vpack.c.bf16 %v614, %v611
        %v621 = vpack.c.bf16 %v615, %v613
        %v622 = vpack.c.bf16 %v618, %v616
        %v623 = vpack.c.bf16 %v619, %v617
        %624 = vmatprep.subr.bf16.mxu0 0
        %625 = vmatpush1.bf16.xpose.msra.mxu0 0
        %626 = vmatprep.subr.bf16.mxu0 0
        %627 = vmatpush1.bf16.xpose.msra.mxu0 0
        %628 = vmatprep.subr.bf16.mxu0 0
        %629 = vmatpush1.bf16.xpose.msra.mxu0 0
        %630 = vmatprep.subr.bf16.mxu0 0
        %631 = vmatpush1.bf16.xpose.msra.mxu0 0
        %632 = vmatprep.subr.bf16.mxu0 %v484
        %633 = vmatpush1.bf16.xpose.msra.mxu0 %v483
        %634 = vmatprep.subr.bf16.mxu0 %v482
        %635 = vmatpush1.bf16.xpose.msra.mxu0 %v481
        %636 = vmatprep.subr.bf16.mxu0 %v480
        %637 = vmatpush1.bf16.xpose.msra.mxu0 %v479
        %638 = vmatprep.subr.bf16.mxu0 %v478
        %639 = vmatpush1.bf16.xpose.msra.mxu0 %v477
        %640 = vmatprep.subr.bf16.mxu0 0
        %641 = vmatpush2.bf16.xpose.msra.mxu0 0
        %642 = vmatprep.subr.bf16.mxu0 0
        %643 = vmatpush2.bf16.xpose.msra.mxu0 0
        %644 = vmatprep.subr.bf16.mxu0 0
        %645 = vmatpush2.bf16.xpose.msra.mxu0 0
        %646 = vmatprep.subr.bf16.mxu0 0
        %647 = vmatpush2.bf16.xpose.msra.mxu0 0
        %648 = vmatprep.subr.bf16.mxu0 0
        %649 = vmatpush2.bf16.xpose.msra.mxu0 0
        %650 = vmatprep.subr.bf16.mxu0 0
        %651 = vmatpush2.bf16.xpose.msra.mxu0 0
        %652 = vmatprep.subr.bf16.mxu0 0
        %653 = vmatpush2.bf16.xpose.msra.mxu0 0
        %654 = vmatprep.subr.bf16.mxu0 0
        %655 = vmatpush2.bf16.xpose.msra.mxu0 0
        %656 = vmatprep.mubr.bf16.mxu0 %v621
        %657 = vmatmul.mubr.bf16.gmra.mxu0 %v620
        %v658 = vpop.f32.mrf.mxu0
        %v659 = vadd.f32 0.0, %v658
        %v660 = vpop.f32.mrf.mxu0
        %v661 = vpop.f32.mrf.mxu0
        %v662 = vadd.f32 0.0, %v661
        %v663 = vpop.f32.mrf.mxu0
        %664 = vmatprep.mubr.bf16.mxu0 %v623
        %665 = vmatmul.mubr.bf16.gmra.mxu0 %v622
        %v666 = vpop.f32.mrf.mxu0
        %v667 = vadd.f32 0.0, %v666
        %v668 = vpop.f32.mrf.mxu0
        %v669 = vpop.f32.mrf.mxu0
        %v670 = vadd.f32 0.0, %v669
        %v671 = vpop.f32.mrf.mxu0
        %672 = vdwg.mxu0
        %v673 = vadd.f32 %v611, %v613
        %674 = vadd.xlane.f32.xlu0 %v673
        %v675 = vpop.xlane.xlu0 %674
        %v676 = vadd.f32 %v614, %v615
        %677 = vadd.xlane.f32.xlu0 %v676
        %v678 = vpop.xlane.xlu0 %677
        %v679 = vadd.f32 %v616, %v617
        %680 = vadd.xlane.f32.xlu0 %v679
        %v681 = vpop.xlane.xlu0 %680
        %v682 = vadd.f32 %v618, %v619
        %683 = vadd.xlane.f32.xlu0 %v682
        %v684 = vpop.xlane.xlu0 %683
        %v685 = vadd.f32 %v675, 1e-06
        %v686 = vadd.f32 %v678, 1e-06
        %v687 = vadd.f32 %v681, 1e-06
        %v688 = vadd.f32 %v684, 1e-06
        %v689 = vrcp.pop %v685
        %v690 = vmul.f32 %v659, %v689
        %v691 = vrcp.pop %v686
        %v692 = vmul.f32 %v662, %v691
        %v693 = vrcp.pop %v687
        %v694 = vmul.f32 %v667, %v693
        %v695 = vrcp.pop %v688
        %v696 = vmul.f32 %v670, %v695
        %v697 = vmul.f32 %v690, %v690
        %v698 = vmul.f32 %v692, %v692
        %v699 = vmul.f32 %v694, %v694
        %v700 = vmul.f32 %v696, %v696
        %v701 = vsel %vm391, %v697, 0.0
        %702 = vadd.xlane.f32.xlu0 %v701
        %v703 = vpop.xlane.xlu0 %702
        %v704 = vsel %vm391, %v698, 0.0
        %705 = vadd.xlane.f32.xlu0 %v704
        %v706 = vpop.xlane.xlu0 %705
        %v707 = vsel %vm391, %v699, 0.0
        %708 = vadd.xlane.f32.xlu0 %v707
        %v709 = vpop.xlane.xlu0 %708
        %v710 = vsel %vm391, %v700, 0.0
        %711 = vadd.xlane.f32.xlu0 %v710
        %v712 = vpop.xlane.xlu0 %711
        %v713 = vrsqrt.pop %v703
        %v714 = vmul.f32 %v703, %v713
        %vm715 = vcmp.eq.f32.partialorder %v703, inf
        %v716 = vsel %vm715, %v703, %v714
        %vm717 = vcmp.eq.f32.partialorder %v703, 0.0
        %v718 = vand.u32 %v703, 2147483648
        %v719 = vsel %vm717, %v718, %v716
        %v720 = vrsqrt.pop %v706
        %v721 = vmul.f32 %v706, %v720
        %vm722 = vcmp.eq.f32.partialorder %v706, inf
        %v723 = vsel %vm722, %v706, %v721
        %vm724 = vcmp.eq.f32.partialorder %v706, 0.0
        %v725 = vand.u32 %v706, 2147483648
        %v726 = vsel %vm724, %v725, %v723
        %v727 = vrsqrt.pop %v709
        %v728 = vmul.f32 %v709, %v727
        %vm729 = vcmp.eq.f32.partialorder %v709, inf
        %v730 = vsel %vm729, %v709, %v728
        %vm731 = vcmp.eq.f32.partialorder %v709, 0.0
        %v732 = vand.u32 %v709, 2147483648
        %v733 = vsel %vm731, %v732, %v730
        %v734 = vrsqrt.pop %v712
        %v735 = vmul.f32 %v712, %v734
        %vm736 = vcmp.eq.f32.partialorder %v712, inf
        %v737 = vsel %vm736, %v712, %v735
        %vm738 = vcmp.eq.f32.partialorder %v712, 0.0
        %v739 = vand.u32 %v712, 2147483648
        %v740 = vsel %vm738, %v739, %v737
        %v741 = vadd.f32 %v719, 1e-06
        %v742 = vadd.f32 %v726, 1e-06
        %v743 = vadd.f32 %v733, 1e-06
        %v744 = vadd.f32 %v740, 1e-06
        %v745 = vrcp.pop %v741
        %v746 = vmul.f32 %v690, %v745
        %v747 = vrcp.pop %v742
        %v748 = vmul.f32 %v692, %v747
        %v749 = vrcp.pop %v743
        %v750 = vmul.f32 %v694, %v749
        %v751 = vrcp.pop %v744
        %v752 = vmul.f32 %v696, %v751
        %v753 = vpack.c.bf16 %v748, %v746
        %v754 = vpack.c.bf16 %v752, %v750
        %v756 = vsel %vm391, %v753, 0
        %v759 = vsel %vm391, %v754, 0
        %761 = vmatprep.subr.bf16.mxu0 0
        %762 = vmatpush1.bf16.msra.mxu0 0
        %763 = vmatprep.subr.bf16.mxu0 0
        %764 = vmatpush1.bf16.msra.mxu0 0
        %765 = vmatprep.subr.bf16.mxu0 0
        %766 = vmatpush1.bf16.msra.mxu0 0
        %767 = vmatprep.subr.bf16.mxu0 0
        %768 = vmatpush1.bf16.msra.mxu0 0
        %769 = vmatprep.subr.bf16.mxu0 %v484
        %770 = vmatpush1.bf16.msra.mxu0 %v483
        %771 = vmatprep.subr.bf16.mxu0 %v482
        %772 = vmatpush1.bf16.msra.mxu0 %v481
        %773 = vmatprep.subr.bf16.mxu0 %v480
        %774 = vmatpush1.bf16.msra.mxu0 %v479
        %775 = vmatprep.subr.bf16.mxu0 %v478
        %776 = vmatpush1.bf16.msra.mxu0 %v477
        %777 = vmatprep.subr.bf16.mxu0 0
        %778 = vmatpush2.bf16.msra.mxu0 0
        %779 = vmatprep.subr.bf16.mxu0 0
        %780 = vmatpush2.bf16.msra.mxu0 0
        %781 = vmatprep.subr.bf16.mxu0 0
        %782 = vmatpush2.bf16.msra.mxu0 0
        %783 = vmatprep.subr.bf16.mxu0 0
        %784 = vmatpush2.bf16.msra.mxu0 0
        %785 = vmatprep.subr.bf16.mxu0 0
        %786 = vmatpush2.bf16.msra.mxu0 0
        %787 = vmatprep.subr.bf16.mxu0 0
        %788 = vmatpush2.bf16.msra.mxu0 0
        %789 = vmatprep.subr.bf16.mxu0 0
        %790 = vmatpush2.bf16.msra.mxu0 0
        %791 = vmatprep.subr.bf16.mxu0 0
        %792 = vmatpush2.bf16.msra.mxu0 0
        %793 = vmatprep.mubr.bf16.mxu0 0
        %794 = vmatmul.mubr.bf16.gmra.mxu0 %v756
        %v795 = vpop.f32.mrf.mxu0
        %v796 = vadd.f32 0.0, %v795
        %v797 = vpop.f32.mrf.mxu0
        %v798 = vadd.f32 0.0, %v797
        %v799 = vpop.f32.mrf.mxu0
        %v800 = vadd.f32 0.0, %v799
        %v801 = vpop.f32.mrf.mxu0
        %v802 = vadd.f32 0.0, %v801
        %803 = vmatprep.mubr.bf16.mxu0 0
        %804 = vmatmul.mubr.bf16.gmra.mxu0 %v759
        %v805 = vpop.f32.mrf.mxu0
        %v806 = vadd.f32 0.0, %v805
        %v807 = vpop.f32.mrf.mxu0
        %v808 = vadd.f32 0.0, %v807
        %v809 = vpop.f32.mrf.mxu0
        %v810 = vadd.f32 0.0, %v809
        %v811 = vpop.f32.mrf.mxu0
        %v812 = vadd.f32 0.0, %v811
        %813 = vdwg.mxu0
        %v814 = vmax.f32 %v796, %v806
        %v815 = vmax.f32 %v800, %v810
        %v816 = vmax.f32 %v814, %v815
        %v817 = vrot.slane %v816, 4
        %v818 = vmax.f32 %v816, %v817
        %v819 = vrot.slane %v818, 2
        %v820 = vmax.f32 %v818, %v819
        %v821 = vrot.slane %v820, 1
        %v822 = vmax.f32 %v820, %v821
        %v823 = vmax.f32 %v798, %v808
        %v824 = vmax.f32 %v802, %v812
        %v825 = vmax.f32 %v823, %v824
        %v826 = vrot.slane %v825, 4
        %v827 = vmax.f32 %v825, %v826
        %v828 = vrot.slane %v827, 2
        %v829 = vmax.f32 %v827, %v828
        %v830 = vrot.slane %v829, 1
        %v831 = vmax.f32 %v829, %v830
        %v832 = vsub.f32 %v796, %v822
        %v833 = vsub.f32 %v798, %v831
        %v834 = vsub.f32 %v800, %v822
        %v835 = vsub.f32 %v802, %v831
        %v836 = vsub.f32 %v806, %v822
        %v837 = vsub.f32 %v808, %v831
        %v838 = vsub.f32 %v810, %v822
        %v839 = vsub.f32 %v812, %v831
        %v840 = vmul.f32 %v832, 1.442695
        %v841 = vpow.pop %v840
        %v842 = vmul.f32 %v833, 1.442695
        %v843 = vpow.pop %v842
        %v844 = vmul.f32 %v834, 1.442695
        %v845 = vpow.pop %v844
        %v846 = vmul.f32 %v835, 1.442695
        %v847 = vpow.pop %v846
        %v848 = vmul.f32 %v836, 1.442695
        %v849 = vpow.pop %v848
        %v850 = vmul.f32 %v837, 1.442695
        %v851 = vpow.pop %v850
        %v852 = vmul.f32 %v838, 1.442695
        %v853 = vpow.pop %v852
        %v854 = vmul.f32 %v839, 1.442695
        %v855 = vpow.pop %v854
        %v856 = vadd.f32 %v841, %v845
        %v857 = vadd.f32 %v856, %v849
        %v858 = vadd.f32 %v857, %v853
        %v859 = vrot.slane %v858, 4
        %v860 = vadd.f32 %v858, %v859
        %v861 = vrot.slane %v860, 2
        %v862 = vadd.f32 %v860, %v861
        %v863 = vrot.slane %v862, 1
        %v864 = vadd.f32 %v862, %v863
        %v865 = vadd.f32 %v843, %v847
        %v866 = vadd.f32 %v865, %v851
        %v867 = vadd.f32 %v866, %v855
        %v868 = vrot.slane %v867, 4
        %v869 = vadd.f32 %v867, %v868
        %v870 = vrot.slane %v869, 2
        %v871 = vadd.f32 %v869, %v870
        %v872 = vrot.slane %v871, 1
        %v873 = vadd.f32 %v871, %v872
        %v874 = vrcp.pop %v864
        %v875 = vmul.f32 %v841, %v874
        %v876 = vrcp.pop %v873
        %v877 = vmul.f32 %v843, %v876
        %v878 = vmul.f32 %v845, %v874
        %v879 = vmul.f32 %v847, %v876
        %v880 = vmul.f32 %v849, %v874
        %v881 = vmul.f32 %v851, %v876
        %v882 = vmul.f32 %v853, %v874
        %v883 = vmul.f32 %v855, %v876
        %v884 = vpack.c.bf16 %v878, %v875
        %v885 = vpack.c.bf16 %v879, %v877
        %v886 = vpack.c.bf16 %v882, %v880
        %v887 = vpack.c.bf16 %v883, %v881
        %888 = vmatprep.subr.bf16.mxu0 0
        %889 = vmatpush1.bf16.xpose.msra.mxu0 0
        %890 = vmatprep.subr.bf16.mxu0 0
        %891 = vmatpush1.bf16.xpose.msra.mxu0 0
        %892 = vmatprep.subr.bf16.mxu0 0
        %893 = vmatpush1.bf16.xpose.msra.mxu0 0
        %894 = vmatprep.subr.bf16.mxu0 0
        %895 = vmatpush1.bf16.xpose.msra.mxu0 0
        %896 = vmatprep.subr.bf16.mxu0 %v484
        %897 = vmatpush1.bf16.xpose.msra.mxu0 %v483
        %898 = vmatprep.subr.bf16.mxu0 %v482
        %899 = vmatpush1.bf16.xpose.msra.mxu0 %v481
        %900 = vmatprep.subr.bf16.mxu0 %v480
        %901 = vmatpush1.bf16.xpose.msra.mxu0 %v479
        %902 = vmatprep.subr.bf16.mxu0 %v478
        %903 = vmatpush1.bf16.xpose.msra.mxu0 %v477
        %904 = vmatprep.subr.bf16.mxu0 0
        %905 = vmatpush2.bf16.xpose.msra.mxu0 0
        %906 = vmatprep.subr.bf16.mxu0 0
        %907 = vmatpush2.bf16.xpose.msra.mxu0 0
        %908 = vmatprep.subr.bf16.mxu0 0
        %909 = vmatpush2.bf16.xpose.msra.mxu0 0
        %910 = vmatprep.subr.bf16.mxu0 0
        %911 = vmatpush2.bf16.xpose.msra.mxu0 0
        %912 = vmatprep.subr.bf16.mxu0 0
        %913 = vmatpush2.bf16.xpose.msra.mxu0 0
        %914 = vmatprep.subr.bf16.mxu0 0
        %915 = vmatpush2.bf16.xpose.msra.mxu0 0
        %916 = vmatprep.subr.bf16.mxu0 0
        %917 = vmatpush2.bf16.xpose.msra.mxu0 0
        %918 = vmatprep.subr.bf16.mxu0 0
        %919 = vmatpush2.bf16.xpose.msra.mxu0 0
        %920 = vmatprep.mubr.bf16.mxu0 %v885
        %921 = vmatmul.mubr.bf16.gmra.mxu0 %v884
        %v922 = vpop.f32.mrf.mxu0
        %v923 = vadd.f32 0.0, %v922
        %v924 = vpop.f32.mrf.mxu0
        %v925 = vpop.f32.mrf.mxu0
        %v926 = vadd.f32 0.0, %v925
        %v927 = vpop.f32.mrf.mxu0
        %928 = vmatprep.mubr.bf16.mxu0 %v887
        %929 = vmatmul.mubr.bf16.gmra.mxu0 %v886
        %v930 = vpop.f32.mrf.mxu0
        %v931 = vadd.f32 0.0, %v930
        %v932 = vpop.f32.mrf.mxu0
        %v933 = vpop.f32.mrf.mxu0
        %v934 = vadd.f32 0.0, %v933
        %v935 = vpop.f32.mrf.mxu0
        %936 = vdwg.mxu0
        %v937 = vadd.f32 %v875, %v877
        %938 = vadd.xlane.f32.xlu0 %v937
        %v939 = vpop.xlane.xlu0 %938
        %v940 = vadd.f32 %v878, %v879
        %941 = vadd.xlane.f32.xlu0 %v940
        %v942 = vpop.xlane.xlu0 %941
        %v943 = vadd.f32 %v880, %v881
        %944 = vadd.xlane.f32.xlu0 %v943
        %v945 = vpop.xlane.xlu0 %944
        %v946 = vadd.f32 %v882, %v883
        %947 = vadd.xlane.f32.xlu0 %v946
        %v948 = vpop.xlane.xlu0 %947
        %v949 = vadd.f32 %v939, 1e-06
        %v950 = vadd.f32 %v942, 1e-06
        %v951 = vadd.f32 %v945, 1e-06
        %v952 = vadd.f32 %v948, 1e-06
        %v953 = vrcp.pop %v949
        %v954 = vmul.f32 %v923, %v953
        %v955 = vrcp.pop %v950
        %v956 = vmul.f32 %v926, %v955
        %v957 = vrcp.pop %v951
        %v958 = vmul.f32 %v931, %v957
        %v959 = vrcp.pop %v952
        %v960 = vmul.f32 %v934, %v959
        %v961 = vmul.f32 %v954, %v954
        %v962 = vmul.f32 %v956, %v956
        %v963 = vmul.f32 %v958, %v958
        %v964 = vmul.f32 %v960, %v960
        %v965 = vsel %vm391, %v961, 0.0
        %966 = vadd.xlane.f32.xlu0 %v965
        %v967 = vpop.xlane.xlu0 %966
        %v968 = vsel %vm391, %v962, 0.0
        %969 = vadd.xlane.f32.xlu0 %v968
        %v970 = vpop.xlane.xlu0 %969
        %v971 = vsel %vm391, %v963, 0.0
        %972 = vadd.xlane.f32.xlu0 %v971
        %v973 = vpop.xlane.xlu0 %972
        %v974 = vsel %vm391, %v964, 0.0
        %975 = vadd.xlane.f32.xlu0 %v974
        %v976 = vpop.xlane.xlu0 %975
        %v977 = vrsqrt.pop %v967
        %v978 = vmul.f32 %v967, %v977
        %vm979 = vcmp.eq.f32.partialorder %v967, inf
        %v980 = vsel %vm979, %v967, %v978
        %vm981 = vcmp.eq.f32.partialorder %v967, 0.0
        %v982 = vand.u32 %v967, 2147483648
        %v983 = vsel %vm981, %v982, %v980
        %v984 = vrsqrt.pop %v970
        %v985 = vmul.f32 %v970, %v984
        %vm986 = vcmp.eq.f32.partialorder %v970, inf
        %v987 = vsel %vm986, %v970, %v985
        %vm988 = vcmp.eq.f32.partialorder %v970, 0.0
        %v989 = vand.u32 %v970, 2147483648
        %v990 = vsel %vm988, %v989, %v987
        %v991 = vrsqrt.pop %v973
        %v992 = vmul.f32 %v973, %v991
        %vm993 = vcmp.eq.f32.partialorder %v973, inf
        %v994 = vsel %vm993, %v973, %v992
        %vm995 = vcmp.eq.f32.partialorder %v973, 0.0
        %v996 = vand.u32 %v973, 2147483648
        %v997 = vsel %vm995, %v996, %v994
        %v998 = vrsqrt.pop %v976
        %v999 = vmul.f32 %v976, %v998
        %vm1000 = vcmp.eq.f32.partialorder %v976, inf
        %v1001 = vsel %vm1000, %v976, %v999
        %vm1002 = vcmp.eq.f32.partialorder %v976, 0.0
        %v1003 = vand.u32 %v976, 2147483648
        %v1004 = vsel %vm1002, %v1003, %v1001
        %v1005 = vadd.f32 %v983, 1e-06
        %v1006 = vadd.f32 %v990, 1e-06
        %v1007 = vadd.f32 %v997, 1e-06
        %v1008 = vadd.f32 %v1004, 1e-06
        %v1009 = vrcp.pop %v1005
        %v1010 = vmul.f32 %v954, %v1009
        %v1011 = vrcp.pop %v1006
        %v1012 = vmul.f32 %v956, %v1011
        %v1013 = vrcp.pop %v1007
        %v1014 = vmul.f32 %v958, %v1013
        %v1015 = vrcp.pop %v1008
        %v1016 = vmul.f32 %v960, %v1015
        %v1017 = vpack.c.bf16 %v1012, %v1010
        %v1018 = vpack.c.bf16 %v1016, %v1014
        %v1020 = vsel %vm391, %v1017, 0
        %v1023 = vsel %vm391, %v1018, 0
        %1025 = vmatprep.subr.bf16.mxu0 0
        %1026 = vmatpush1.bf16.msra.mxu0 0
        %1027 = vmatprep.subr.bf16.mxu0 0
        %1028 = vmatpush1.bf16.msra.mxu0 0
        %1029 = vmatprep.subr.bf16.mxu0 0
        %1030 = vmatpush1.bf16.msra.mxu0 0
        %1031 = vmatprep.subr.bf16.mxu0 0
        %1032 = vmatpush1.bf16.msra.mxu0 0
        %1033 = vmatprep.subr.bf16.mxu0 %v484
        %1034 = vmatpush1.bf16.msra.mxu0 %v483
        %1035 = vmatprep.subr.bf16.mxu0 %v482
        %1036 = vmatpush1.bf16.msra.mxu0 %v481
        %1037 = vmatprep.subr.bf16.mxu0 %v480
        %1038 = vmatpush1.bf16.msra.mxu0 %v479
        %1039 = vmatprep.subr.bf16.mxu0 %v478
        %1040 = vmatpush1.bf16.msra.mxu0 %v477
        %1041 = vmatprep.subr.bf16.mxu0 0
        %1042 = vmatpush2.bf16.msra.mxu0 0
        %1043 = vmatprep.subr.bf16.mxu0 0
        %1044 = vmatpush2.bf16.msra.mxu0 0
        %1045 = vmatprep.subr.bf16.mxu0 0
        %1046 = vmatpush2.bf16.msra.mxu0 0
        %1047 = vmatprep.subr.bf16.mxu0 0
        %1048 = vmatpush2.bf16.msra.mxu0 0
        %1049 = vmatprep.subr.bf16.mxu0 0
        %1050 = vmatpush2.bf16.msra.mxu0 0
        %1051 = vmatprep.subr.bf16.mxu0 0
        %1052 = vmatpush2.bf16.msra.mxu0 0
        %1053 = vmatprep.subr.bf16.mxu0 0
        %1054 = vmatpush2.bf16.msra.mxu0 0
        %1055 = vmatprep.subr.bf16.mxu0 0
        %1056 = vmatpush2.bf16.msra.mxu0 0
        %1057 = vmatprep.mubr.bf16.mxu0 0
        %1058 = vmatmul.mubr.bf16.gmra.mxu0 %v1020
        %v1059 = vpop.f32.mrf.mxu0
        %v1060 = vadd.f32 0.0, %v1059
        %v1061 = vpop.f32.mrf.mxu0
        %v1062 = vadd.f32 0.0, %v1061
        %v1063 = vpop.f32.mrf.mxu0
        %v1064 = vadd.f32 0.0, %v1063
        %v1065 = vpop.f32.mrf.mxu0
        %v1066 = vadd.f32 0.0, %v1065
        %1067 = vmatprep.mubr.bf16.mxu0 0
        %1068 = vmatmul.mubr.bf16.gmra.mxu0 %v1023
        %v1069 = vpop.f32.mrf.mxu0
        %v1070 = vadd.f32 0.0, %v1069
        %v1071 = vpop.f32.mrf.mxu0
        %v1072 = vadd.f32 0.0, %v1071
        %v1073 = vpop.f32.mrf.mxu0
        %v1074 = vadd.f32 0.0, %v1073
        %v1075 = vpop.f32.mrf.mxu0
        %v1076 = vadd.f32 0.0, %v1075
        %1077 = vdwg.mxu0
        %v1078 = vmax.f32 %v1060, %v1070
        %v1079 = vmax.f32 %v1064, %v1074
        %v1080 = vmax.f32 %v1078, %v1079
        %v1081 = vrot.slane %v1080, 4
        %v1082 = vmax.f32 %v1080, %v1081
        %v1083 = vrot.slane %v1082, 2
        %v1084 = vmax.f32 %v1082, %v1083
        %v1085 = vrot.slane %v1084, 1
        %v1086 = vmax.f32 %v1084, %v1085
        %v1087 = vmax.f32 %v1062, %v1072
        %v1088 = vmax.f32 %v1066, %v1076
        %v1089 = vmax.f32 %v1087, %v1088
        %v1090 = vrot.slane %v1089, 4
        %v1091 = vmax.f32 %v1089, %v1090
        %v1092 = vrot.slane %v1091, 2
        %v1093 = vmax.f32 %v1091, %v1092
        %v1094 = vrot.slane %v1093, 1
        %v1095 = vmax.f32 %v1093, %v1094
        %v1096 = vsub.f32 %v1060, %v1086
        %v1097 = vsub.f32 %v1062, %v1095
        %v1098 = vsub.f32 %v1064, %v1086
        %v1099 = vsub.f32 %v1066, %v1095
        %v1100 = vsub.f32 %v1070, %v1086
        %v1101 = vsub.f32 %v1072, %v1095
        %v1102 = vsub.f32 %v1074, %v1086
        %v1103 = vsub.f32 %v1076, %v1095
        %v1104 = vmul.f32 %v1096, 1.442695
        %v1105 = vpow.pop %v1104
        %v1106 = vmul.f32 %v1097, 1.442695
        %v1107 = vpow.pop %v1106
        %v1108 = vmul.f32 %v1098, 1.442695
        %v1109 = vpow.pop %v1108
        %v1110 = vmul.f32 %v1099, 1.442695
        %v1111 = vpow.pop %v1110
        %v1112 = vmul.f32 %v1100, 1.442695
        %v1113 = vpow.pop %v1112
        %v1114 = vmul.f32 %v1101, 1.442695
        %v1115 = vpow.pop %v1114
        %v1116 = vmul.f32 %v1102, 1.442695
        %v1117 = vpow.pop %v1116
        %v1118 = vmul.f32 %v1103, 1.442695
        %v1119 = vpow.pop %v1118
        %v1120 = vadd.f32 %v1105, %v1109
        %v1121 = vadd.f32 %v1120, %v1113
        %v1122 = vadd.f32 %v1121, %v1117
        %v1123 = vrot.slane %v1122, 4
        %v1124 = vadd.f32 %v1122, %v1123
        %v1125 = vrot.slane %v1124, 2
        %v1126 = vadd.f32 %v1124, %v1125
        %v1127 = vrot.slane %v1126, 1
        %v1128 = vadd.f32 %v1126, %v1127
        %v1129 = vadd.f32 %v1107, %v1111
        %v1130 = vadd.f32 %v1129, %v1115
        %v1131 = vadd.f32 %v1130, %v1119
        %v1132 = vrot.slane %v1131, 4
        %v1133 = vadd.f32 %v1131, %v1132
        %v1134 = vrot.slane %v1133, 2
        %v1135 = vadd.f32 %v1133, %v1134
        %v1136 = vrot.slane %v1135, 1
        %v1137 = vadd.f32 %v1135, %v1136
        %v1138 = vrcp.pop %v1128
        %v1139 = vmul.f32 %v1105, %v1138
        %v1140 = vrcp.pop %v1137
        %v1141 = vmul.f32 %v1107, %v1140
        %v1142 = vmul.f32 %v1109, %v1138
        %v1143 = vmul.f32 %v1111, %v1140
        %v1144 = vmul.f32 %v1113, %v1138
        %v1145 = vmul.f32 %v1115, %v1140
        %v1146 = vmul.f32 %v1117, %v1138
        %v1147 = vmul.f32 %v1119, %v1140
        %v1148 = vpack.c.bf16 %v1142, %v1139
        %v1149 = vpack.c.bf16 %v1143, %v1141
        %v1150 = vpack.c.bf16 %v1146, %v1144
        %v1151 = vpack.c.bf16 %v1147, %v1145
        %1152 = vmatprep.subr.bf16.mxu0 0
        %1153 = vmatpush1.bf16.xpose.msra.mxu0 0
        %1154 = vmatprep.subr.bf16.mxu0 0
        %1155 = vmatpush1.bf16.xpose.msra.mxu0 0
        %1156 = vmatprep.subr.bf16.mxu0 0
        %1157 = vmatpush1.bf16.xpose.msra.mxu0 0
        %1158 = vmatprep.subr.bf16.mxu0 0
        %1159 = vmatpush1.bf16.xpose.msra.mxu0 0
        %1160 = vmatprep.subr.bf16.mxu0 %v484
        %1161 = vmatpush1.bf16.xpose.msra.mxu0 %v483
        %1162 = vmatprep.subr.bf16.mxu0 %v482
        %1163 = vmatpush1.bf16.xpose.msra.mxu0 %v481
        %1164 = vmatprep.subr.bf16.mxu0 %v480
        %1165 = vmatpush1.bf16.xpose.msra.mxu0 %v479
        %1166 = vmatprep.subr.bf16.mxu0 %v478
        %1167 = vmatpush1.bf16.xpose.msra.mxu0 %v477
        %1168 = vmatprep.subr.bf16.mxu0 0
        %1169 = vmatpush2.bf16.xpose.msra.mxu0 0
        %1170 = vmatprep.subr.bf16.mxu0 0
        %1171 = vmatpush2.bf16.xpose.msra.mxu0 0
        %1172 = vmatprep.subr.bf16.mxu0 0
        %1173 = vmatpush2.bf16.xpose.msra.mxu0 0
        %1174 = vmatprep.subr.bf16.mxu0 0
        %1175 = vmatpush2.bf16.xpose.msra.mxu0 0
        %1176 = vmatprep.subr.bf16.mxu0 0
        %1177 = vmatpush2.bf16.xpose.msra.mxu0 0
        %1178 = vmatprep.subr.bf16.mxu0 0
        %1179 = vmatpush2.bf16.xpose.msra.mxu0 0
        %1180 = vmatprep.subr.bf16.mxu0 0
        %1181 = vmatpush2.bf16.xpose.msra.mxu0 0
        %1182 = vmatprep.subr.bf16.mxu0 0
        %1183 = vmatpush2.bf16.xpose.msra.mxu0 0
        %1184 = vmatprep.mubr.bf16.mxu0 %v1149
        %1185 = vmatmul.mubr.bf16.gmra.mxu0 %v1148
        %v1186 = vpop.f32.mrf.mxu0
        %v1187 = vadd.f32 0.0, %v1186
        %v1188 = vpop.f32.mrf.mxu0
        %v1189 = vpop.f32.mrf.mxu0
        %v1190 = vadd.f32 0.0, %v1189
        %v1191 = vpop.f32.mrf.mxu0
        %1192 = vmatprep.mubr.bf16.mxu0 %v1151
        %1193 = vmatmul.mubr.bf16.gmra.mxu0 %v1150
        %v1194 = vpop.f32.mrf.mxu0
        %v1195 = vadd.f32 0.0, %v1194
        %v1196 = vpop.f32.mrf.mxu0
        %v1197 = vpop.f32.mrf.mxu0
        %v1198 = vadd.f32 0.0, %v1197
        %v1199 = vpop.f32.mrf.mxu0
        %1200 = vdwg.mxu0
        %v1201 = vadd.f32 %v1139, %v1141
        %1202 = vadd.xlane.f32.xlu0 %v1201
        %v1203 = vpop.xlane.xlu0 %1202
        %v1204 = vadd.f32 %v1142, %v1143
        %1205 = vadd.xlane.f32.xlu0 %v1204
        %v1206 = vpop.xlane.xlu0 %1205
        %v1207 = vadd.f32 %v1144, %v1145
        %1208 = vadd.xlane.f32.xlu0 %v1207
        %v1209 = vpop.xlane.xlu0 %1208
        %v1210 = vadd.f32 %v1146, %v1147
        %1211 = vadd.xlane.f32.xlu0 %v1210
        %v1212 = vpop.xlane.xlu0 %1211
        %v1213 = vadd.f32 %v1203, 1e-06
        %v1214 = vadd.f32 %v1206, 1e-06
        %v1215 = vadd.f32 %v1209, 1e-06
        %v1216 = vadd.f32 %v1212, 1e-06
        %v1217 = vrcp.pop %v1213
        %v1218 = vmul.f32 %v1187, %v1217
        %v1219 = vrcp.pop %v1214
        %v1220 = vmul.f32 %v1190, %v1219
        %v1221 = vrcp.pop %v1215
        %v1222 = vmul.f32 %v1195, %v1221
        %v1223 = vrcp.pop %v1216
        %v1224 = vmul.f32 %v1198, %v1223
        %v1225 = vmul.f32 %v1218, %v1218
        %v1226 = vmul.f32 %v1220, %v1220
        %v1227 = vmul.f32 %v1222, %v1222
        %v1228 = vmul.f32 %v1224, %v1224
        %v1229 = vsel %vm391, %v1225, 0.0
        %1230 = vadd.xlane.f32.xlu0 %v1229
        %v1231 = vpop.xlane.xlu0 %1230
        %v1232 = vsel %vm391, %v1226, 0.0
        %1233 = vadd.xlane.f32.xlu0 %v1232
        %v1234 = vpop.xlane.xlu0 %1233
        %v1235 = vsel %vm391, %v1227, 0.0
        %1236 = vadd.xlane.f32.xlu0 %v1235
        %v1237 = vpop.xlane.xlu0 %1236
        %v1238 = vsel %vm391, %v1228, 0.0
        %1239 = vadd.xlane.f32.xlu0 %v1238
        %v1240 = vpop.xlane.xlu0 %1239
        %v1241 = vrsqrt.pop %v1231
        %v1242 = vmul.f32 %v1231, %v1241
        %vm1243 = vcmp.eq.f32.partialorder %v1231, inf
        %v1244 = vsel %vm1243, %v1231, %v1242
        %vm1245 = vcmp.eq.f32.partialorder %v1231, 0.0
        %v1246 = vand.u32 %v1231, 2147483648
        %v1247 = vsel %vm1245, %v1246, %v1244
        %v1248 = vrsqrt.pop %v1234
        %v1249 = vmul.f32 %v1234, %v1248
        %vm1250 = vcmp.eq.f32.partialorder %v1234, inf
        %v1251 = vsel %vm1250, %v1234, %v1249
        %vm1252 = vcmp.eq.f32.partialorder %v1234, 0.0
        %v1253 = vand.u32 %v1234, 2147483648
        %v1254 = vsel %vm1252, %v1253, %v1251
        %v1255 = vrsqrt.pop %v1237
        %v1256 = vmul.f32 %v1237, %v1255
        %vm1257 = vcmp.eq.f32.partialorder %v1237, inf
        %v1258 = vsel %vm1257, %v1237, %v1256
        %vm1259 = vcmp.eq.f32.partialorder %v1237, 0.0
        %v1260 = vand.u32 %v1237, 2147483648
        %v1261 = vsel %vm1259, %v1260, %v1258
        %v1262 = vrsqrt.pop %v1240
        %v1263 = vmul.f32 %v1240, %v1262
        %vm1264 = vcmp.eq.f32.partialorder %v1240, inf
        %v1265 = vsel %vm1264, %v1240, %v1263
        %vm1266 = vcmp.eq.f32.partialorder %v1240, 0.0
        %v1267 = vand.u32 %v1240, 2147483648
        %v1268 = vsel %vm1266, %v1267, %v1265
        %v1269 = vadd.f32 %v1247, 1e-06
        %v1270 = vadd.f32 %v1254, 1e-06
        %v1271 = vadd.f32 %v1261, 1e-06
        %v1272 = vadd.f32 %v1268, 1e-06
        %v1273 = vrcp.pop %v1269
        %v1274 = vmul.f32 %v1218, %v1273
        %v1275 = vrcp.pop %v1270
        %v1276 = vmul.f32 %v1220, %v1275
        %v1277 = vrcp.pop %v1271
        %v1278 = vmul.f32 %v1222, %v1277
        %v1279 = vrcp.pop %v1272
        %v1280 = vmul.f32 %v1224, %v1279
        %1281 = vxpose.xlu0.b32.start [1/16] %v1274, 128
        %1282 = vxpose.xlu0.b32.cont [2/16] %v1276, 128
        %1283 = vxpose.xlu0.b32.cont [3/16] %v1278, 128
        %1284 = vxpose.xlu0.b32.cont [4/16] %v1280, 128
        %1285 = vxpose.xlu0.b32.cont [5/16] 0.0, 128
        %1286 = vxpose.xlu0.b32.cont [6/16] 0.0, 128
        %1287 = vxpose.xlu0.b32.cont [7/16] 0.0, 128
        %1288 = vxpose.xlu0.b32.cont [8/16] 0.0, 128
        %1289 = vxpose.xlu0.b32.cont [9/16] 0.0, 128
        %1290 = vxpose.xlu0.b32.cont [10/16] 0.0, 128
        %1291 = vxpose.xlu0.b32.cont [11/16] 0.0, 128
        %1292 = vxpose.xlu0.b32.cont [12/16] 0.0, 128
        %1293 = vxpose.xlu0.b32.cont [13/16] 0.0, 128
        %1294 = vxpose.xlu0.b32.cont [14/16] 0.0, 128
        %1295 = vxpose.xlu0.b32.cont [15/16] 0.0, 128
        %1296 = vxpose.xlu0.b32.end [16/16] 0.0, 128
        %v1297 = vpop.trf.xlu0
        %v1298 = vpop.trf.xlu0
        %v1299 = vpop.trf.xlu0
        %v1300 = vpop.trf.xlu0
        %v1301 = vpop.trf.xlu0
        %v1302 = vpop.trf.xlu0
        %v1303 = vpop.trf.xlu0
        %v1304 = vpop.trf.xlu0
        %v1305 = vpop.trf.xlu0
        %v1306 = vpop.trf.xlu0
        %v1307 = vpop.trf.xlu0
        %v1308 = vpop.trf.xlu0
        %v1309 = vpop.trf.xlu0
        %v1310 = vpop.trf.xlu0
        %v1311 = vpop.trf.xlu0
        %v1312 = vpop.trf.xlu0
        %v1313 = vpack.c.bf16 %v1298, %v1297
        %v1314 = vpack.c.bf16 %v1300, %v1299
        %v1315 = vpack.c.bf16 %v1302, %v1301
        %v1316 = vpack.c.bf16 %v1304, %v1303
        %vm1317 = vcmask 261120
        %v1319 = vsel %vm1317, %v1313, 0
        %v1322 = vsel %vm1317, %v1314, 0
        %v1325 = vsel %vm1317, %v1315, 0
        %v1328 = vsel %vm1317, %v1316, 0
        %1330 = vmatprep.subr.bf16.mxu0 0
        %1331 = vmatpush1.bf16.msra.mxu0 0
        %1332 = vmatprep.subr.bf16.mxu0 0
        %1333 = vmatpush1.bf16.msra.mxu0 0
        %1334 = vmatprep.subr.bf16.mxu0 0
        %1335 = vmatpush1.bf16.msra.mxu0 0
        %1336 = vmatprep.subr.bf16.mxu0 0
        %1337 = vmatpush1.bf16.msra.mxu0 0
        %1338 = vmatprep.subr.bf16.mxu0 0
        %1339 = vmatpush1.bf16.msra.mxu0 0
        %1340 = vmatprep.subr.bf16.mxu0 0
        %1341 = vmatpush1.bf16.msra.mxu0 0
        %1342 = vmatprep.subr.bf16.mxu0 %v1151
        %1343 = vmatpush1.bf16.msra.mxu0 %v1150
        %1344 = vmatprep.subr.bf16.mxu0 %v1149
        %1345 = vmatpush1.bf16.msra.mxu0 %v1148
        %1346 = vmatprep.subr.bf16.mxu0 0
        %1347 = vmatpush2.bf16.msra.mxu0 0
        %1348 = vmatprep.subr.bf16.mxu0 0
        %1349 = vmatpush2.bf16.msra.mxu0 0
        %1350 = vmatprep.subr.bf16.mxu0 0
        %1351 = vmatpush2.bf16.msra.mxu0 0
        %1352 = vmatprep.subr.bf16.mxu0 0
        %1353 = vmatpush2.bf16.msra.mxu0 0
        %1354 = vmatprep.subr.bf16.mxu0 0
        %1355 = vmatpush2.bf16.msra.mxu0 0
        %1356 = vmatprep.subr.bf16.mxu0 0
        %1357 = vmatpush2.bf16.msra.mxu0 0
        %1358 = vmatprep.subr.bf16.mxu0 0
        %1359 = vmatpush2.bf16.msra.mxu0 0
        %1360 = vmatprep.subr.bf16.mxu0 0
        %1361 = vmatpush2.bf16.msra.mxu0 0
        %1362 = vmatprep.mubr.bf16.mxu0 0
        %1363 = vmatmul.mubr.bf16.gmra.mxu0 %v1319
        %v1364 = vpop.f32.mrf.mxu0
        %v1365 = vadd.f32 0.0, %v1364
        %v1366 = vpop.f32.mrf.mxu0
        %v1367 = vadd.f32 0.0, %v1366
        %v1368 = vpop.f32.mrf.mxu0
        %v1369 = vadd.f32 0.0, %v1368
        %v1370 = vpop.f32.mrf.mxu0
        %v1371 = vadd.f32 0.0, %v1370
        %1372 = vmatprep.mubr.bf16.mxu0 0
        %1373 = vmatmul.mubr.bf16.gmra.mxu0 %v1322
        %v1374 = vpop.f32.mrf.mxu0
        %v1375 = vadd.f32 0.0, %v1374
        %v1376 = vpop.f32.mrf.mxu0
        %v1377 = vadd.f32 0.0, %v1376
        %v1378 = vpop.f32.mrf.mxu0
        %v1379 = vadd.f32 0.0, %v1378
        %v1380 = vpop.f32.mrf.mxu0
        %v1381 = vadd.f32 0.0, %v1380
        %1382 = vmatprep.mubr.bf16.mxu0 0
        %1383 = vmatmul.mubr.bf16.gmra.mxu0 %v1325
        %v1384 = vpop.f32.mrf.mxu0
        %v1385 = vadd.f32 0.0, %v1384
        %v1386 = vpop.f32.mrf.mxu0
        %v1387 = vadd.f32 0.0, %v1386
        %v1388 = vpop.f32.mrf.mxu0
        %v1389 = vadd.f32 0.0, %v1388
        %v1390 = vpop.f32.mrf.mxu0
        %v1391 = vadd.f32 0.0, %v1390
        %1392 = vmatprep.mubr.bf16.mxu0 0
        %1393 = vmatmul.mubr.bf16.gmra.mxu0 %v1328
        %v1394 = vpop.f32.mrf.mxu0
        %v1395 = vadd.f32 0.0, %v1394
        %v1396 = vpop.f32.mrf.mxu0
        %v1397 = vadd.f32 0.0, %v1396
        %v1398 = vpop.f32.mrf.mxu0
        %v1399 = vadd.f32 0.0, %v1398
        %v1400 = vpop.f32.mrf.mxu0
        %v1401 = vadd.f32 0.0, %v1400
        %1402 = vdwg.mxu0
        %v1403 = vmax.f32 %v1365, 0.0
        %v1404 = vmax.f32 %v1367, 0.0
        %v1405 = vmax.f32 %v1369, 0.0
        %v1406 = vmax.f32 %v1371, 0.0
        %v1407 = vmax.f32 %v1375, 0.0
        %v1408 = vmax.f32 %v1377, 0.0
        %v1409 = vmax.f32 %v1379, 0.0
        %v1410 = vmax.f32 %v1381, 0.0
        %v1411 = vmax.f32 %v1385, 0.0
        %v1412 = vmax.f32 %v1387, 0.0
        %v1413 = vmax.f32 %v1389, 0.0
        %v1414 = vmax.f32 %v1391, 0.0
        %v1415 = vmax.f32 %v1395, 0.0
        %v1416 = vmax.f32 %v1397, 0.0
        %v1417 = vmax.f32 %v1399, 0.0
        %v1418 = vmax.f32 %v1401, 0.0
        %v1419 = vld [vmem:[%s4] sm:$0xf]
        %v1420 = vld [vmem:[%s4 + $0x4] sm:$0xf]
        %v1421 = vld [vmem:[%s4 + $0x8] sm:$0xf]
        %v1422 = vld [vmem:[%s4 + $0xc] sm:$0xf]
        %v1423 = vld [vmem:[%s4 + $0x10] sm:$0xf]
        %v1424 = vld [vmem:[%s4 + $0x14] sm:$0xf]
        %v1425 = vld [vmem:[%s4 + $0x18] sm:$0xf]
        %v1426 = vld [vmem:[%s4 + $0x1c] sm:$0xf]
        %v1427 = vpack.c.bf16 %v1405, %v1403
        %v1428 = vpack.c.bf16 %v1406, %v1404
        %v1429 = vpack.c.bf16 %v1409, %v1407
        %v1430 = vpack.c.bf16 %v1410, %v1408
        %v1431 = vpack.c.bf16 %v1413, %v1411
        %v1432 = vpack.c.bf16 %v1414, %v1412
        %v1433 = vpack.c.bf16 %v1417, %v1415
        %v1434 = vpack.c.bf16 %v1418, %v1416
        %v1435 = vld [vmem:[%s5] sm:$0xff]
        %v1436 = vld [vmem:[%s5 + $0x8] sm:$0xff]
        %v1437 = vld [vmem:[%s5 + $0x10] sm:$0xff]
        %v1438 = vld [vmem:[%s5 + $0x18] sm:$0xff]
        %v1439 = vld [vmem:[%s5 + $0x20] sm:$0xff]
        %v1440 = vld [vmem:[%s5 + $0x28] sm:$0xff]
        %v1441 = vld [vmem:[%s5 + $0x30] sm:$0xff]
        %v1442 = vld [vmem:[%s5 + $0x38] sm:$0xff]
        %1444 = vset.pattern.permute.xlu0 0
        %1445 = vperm.xlu0 %1444, %v1435
        %v1446 = vpop.permute.xlu0 %1445
        %1449 = vset.pattern.permute.xlu0 0
        %1450 = vperm.xlu0 %1449, %v1436
        %v1451 = vpop.permute.xlu0 %1450
        %1454 = vset.pattern.permute.xlu0 0
        %1455 = vperm.xlu0 %1454, %v1437
        %v1456 = vpop.permute.xlu0 %1455
        %1459 = vset.pattern.permute.xlu0 0
        %1460 = vperm.xlu0 %1459, %v1438
        %v1461 = vpop.permute.xlu0 %1460
        %1464 = vset.pattern.permute.xlu0 0
        %1465 = vperm.xlu0 %1464, %v1439
        %v1466 = vpop.permute.xlu0 %1465
        %1469 = vset.pattern.permute.xlu0 0
        %1470 = vperm.xlu0 %1469, %v1440
        %v1471 = vpop.permute.xlu0 %1470
        %1474 = vset.pattern.permute.xlu0 0
        %1475 = vperm.xlu0 %1474, %v1441
        %v1476 = vpop.permute.xlu0 %1475
        %1479 = vset.pattern.permute.xlu0 0
        %1480 = vperm.xlu0 %1479, %v1442
        %v1481 = vpop.permute.xlu0 %1480
        %v1491 = vunpack.c.l.b16 %v1419
        %v1492 = vunpack.c.l.b16 %v1420
        %v1493 = vunpack.c.l.b16 %v1421
        %v1494 = vunpack.c.l.b16 %v1422
        %v1495 = vunpack.c.l.b16 %v1423
        %v1496 = vunpack.c.l.b16 %v1424
        %v1497 = vunpack.c.l.b16 %v1425
        %v1498 = vunpack.c.l.b16 %v1426
        %v1499 = vpack.c.b16 %v1492, %v1491
        %v1500 = vpack.c.b16 %v1494, %v1493
        %v1501 = vpack.c.b16 %v1496, %v1495
        %v1502 = vpack.c.b16 %v1498, %v1497
        %v1504 = vsel %vm391, %v1499, 0
        %v1507 = vsel %vm391, %v1500, 0
        %v1510 = vsel %vm391, %v1501, 0
        %v1513 = vsel %vm391, %v1502, 0
        %1515 = vmatprep.subr.bf16.mxu0 0
        %1516 = vmatpush1.bf16.msra.mxu0 0
        %1517 = vmatprep.subr.bf16.mxu0 0
        %1518 = vmatpush1.bf16.msra.mxu0 0
        %1519 = vmatprep.subr.bf16.mxu0 0
        %1520 = vmatpush1.bf16.msra.mxu0 0
        %1521 = vmatprep.subr.bf16.mxu0 0
        %1522 = vmatpush1.bf16.msra.mxu0 0
        %1523 = vmatprep.subr.bf16.mxu0 %v1434
        %1524 = vmatpush1.bf16.msra.mxu0 %v1433
        %1525 = vmatprep.subr.bf16.mxu0 %v1432
        %1526 = vmatpush1.bf16.msra.mxu0 %v1431
        %1527 = vmatprep.subr.bf16.mxu0 %v1430
        %1528 = vmatpush1.bf16.msra.mxu0 %v1429
        %1529 = vmatprep.subr.bf16.mxu0 %v1428
        %1530 = vmatpush1.bf16.msra.mxu0 %v1427
        %1531 = vmatprep.subr.bf16.mxu0 0
        %1532 = vmatpush2.bf16.msra.mxu0 0
        %1533 = vmatprep.subr.bf16.mxu0 0
        %1534 = vmatpush2.bf16.msra.mxu0 0
        %1535 = vmatprep.subr.bf16.mxu0 0
        %1536 = vmatpush2.bf16.msra.mxu0 0
        %1537 = vmatprep.subr.bf16.mxu0 0
        %1538 = vmatpush2.bf16.msra.mxu0 0
        %1539 = vmatprep.subr.bf16.mxu0 0
        %1540 = vmatpush2.bf16.msra.mxu0 0
        %1541 = vmatprep.subr.bf16.mxu0 0
        %1542 = vmatpush2.bf16.msra.mxu0 0
        %1543 = vmatprep.subr.bf16.mxu0 0
        %1544 = vmatpush2.bf16.msra.mxu0 0
        %1545 = vmatprep.subr.bf16.mxu0 0
        %1546 = vmatpush2.bf16.msra.mxu0 0
        %1547 = vmatprep.mubr.bf16.mxu0 0
        %1548 = vmatmul.mubr.bf16.gmra.mxu0 %v1504
        %v1549 = vpop.f32.mrf.mxu0
        %v1550 = vadd.f32 %v1446, %v1549
        %v1551 = vpop.f32.mrf.mxu0
        %v1552 = vadd.f32 %v1446, %v1551
        %v1553 = vpop.f32.mrf.mxu0
        %v1554 = vadd.f32 %v1451, %v1553
        %v1555 = vpop.f32.mrf.mxu0
        %v1556 = vadd.f32 %v1451, %v1555
        %1557 = vmatprep.mubr.bf16.mxu0 0
        %1558 = vmatmul.mubr.bf16.gmra.mxu0 %v1507
        %v1559 = vpop.f32.mrf.mxu0
        %v1560 = vadd.f32 %v1456, %v1559
        %v1561 = vpop.f32.mrf.mxu0
        %v1562 = vadd.f32 %v1456, %v1561
        %v1563 = vpop.f32.mrf.mxu0
        %v1564 = vadd.f32 %v1461, %v1563
        %v1565 = vpop.f32.mrf.mxu0
        %v1566 = vadd.f32 %v1461, %v1565
        %1567 = vmatprep.mubr.bf16.mxu0 0
        %1568 = vmatmul.mubr.bf16.gmra.mxu0 %v1510
        %v1569 = vpop.f32.mrf.mxu0
        %v1570 = vadd.f32 %v1466, %v1569
        %v1571 = vpop.f32.mrf.mxu0
        %v1572 = vadd.f32 %v1466, %v1571
        %v1573 = vpop.f32.mrf.mxu0
        %v1574 = vadd.f32 %v1471, %v1573
        %v1575 = vpop.f32.mrf.mxu0
        %v1576 = vadd.f32 %v1471, %v1575
        %1577 = vmatprep.mubr.bf16.mxu0 0
        %1578 = vmatmul.mubr.bf16.gmra.mxu0 %v1513
        %v1579 = vpop.f32.mrf.mxu0
        %v1580 = vadd.f32 %v1476, %v1579
        %v1581 = vpop.f32.mrf.mxu0
        %v1582 = vadd.f32 %v1476, %v1581
        %v1583 = vpop.f32.mrf.mxu0
        %v1584 = vadd.f32 %v1481, %v1583
        %v1585 = vpop.f32.mrf.mxu0
        %v1586 = vadd.f32 %v1481, %v1585
        %1587 = vdwg.mxu0
        %v1588 = vadd.f32 %v1550, %v299
        %v1589 = vadd.f32 %v1552, %v300
        %v1590 = vadd.f32 %v1554, %v301
        %v1591 = vadd.f32 %v1556, %v302
        %v1592 = vadd.f32 %v1560, %v303
        %v1593 = vadd.f32 %v1562, %v304
        %v1594 = vadd.f32 %v1564, %v305
        %v1595 = vadd.f32 %v1566, %v306
        %v1596 = vadd.f32 %v1570, %v307
        %v1597 = vadd.f32 %v1572, %v308
        %v1598 = vadd.f32 %v1574, %v309
        %v1599 = vadd.f32 %v1576, %v310
        %v1600 = vadd.f32 %v1580, %v311
        %v1601 = vadd.f32 %v1582, %v312
        %v1602 = vadd.f32 %v1584, %v313
        %v1603 = vadd.f32 %v1586, %v314
        %v1604 = vmax.f32 %v1588, 0.0
        %v1605 = vmax.f32 %v1589, 0.0
        %v1606 = vmax.f32 %v1590, 0.0
        %v1607 = vmax.f32 %v1591, 0.0
        %v1608 = vmax.f32 %v1592, 0.0
        %v1609 = vmax.f32 %v1593, 0.0
        %v1610 = vmax.f32 %v1594, 0.0
        %v1611 = vmax.f32 %v1595, 0.0
        %v1612 = vmax.f32 %v1596, 0.0
        %v1613 = vmax.f32 %v1597, 0.0
        %v1614 = vmax.f32 %v1598, 0.0
        %v1615 = vmax.f32 %v1599, 0.0
        %v1616 = vmax.f32 %v1600, 0.0
        %v1617 = vmax.f32 %v1601, 0.0
        %v1618 = vmax.f32 %v1602, 0.0
        %v1619 = vmax.f32 %v1603, 0.0
        %1620 = vst [vmem:[%s289] sm:$0xff] %v1604
        %1621 = vst [vmem:[%s289 + $0x8] sm:$0xff] %v1605
        %1622 = vst [vmem:[%s289 + $0x10] sm:$0xff] %v1606
        %1623 = vst [vmem:[%s289 + $0x18] sm:$0xff] %v1607
        %1624 = vst [vmem:[%s289 + $0x20] sm:$0xff] %v1608
        %1625 = vst [vmem:[%s289 + $0x28] sm:$0xff] %v1609
        %1626 = vst [vmem:[%s289 + $0x30] sm:$0xff] %v1610
        %1627 = vst [vmem:[%s289 + $0x38] sm:$0xff] %v1611
        %1628 = vst [vmem:[%s289 + $0x40] sm:$0xff] %v1612
        %1629 = vst [vmem:[%s289 + $0x48] sm:$0xff] %v1613
        %1630 = vst [vmem:[%s289 + $0x50] sm:$0xff] %v1614
        %1631 = vst [vmem:[%s289 + $0x58] sm:$0xff] %v1615
        %1632 = vst [vmem:[%s289 + $0x60] sm:$0xff] %v1616
        %1633 = vst [vmem:[%s289 + $0x68] sm:$0xff] %v1617
        %1634 = vst [vmem:[%s289 + $0x70] sm:$0xff] %v1618
        %1635 = vst [vmem:[%s289 + $0x78] sm:$0xff] %v1619
        %1636 = vst.msk [vmem:[%s279] sm:$0xff] %vm391, %v1274
        %1637 = vst.msk [vmem:[%s279 + $0x8] sm:$0xff] %vm391, %v1276
        %1638 = vst.msk [vmem:[%s279 + $0x10] sm:$0xff] %vm391, %v1278
        %1639 = vst.msk [vmem:[%s279 + $0x18] sm:$0xff] %vm391, %v1280
        %p1640 = scmp.lt.s32.totalorder %s22, 1
        %s1641 = scalar_select %p1640, %s22, 1
        %s1642 = smul.addr %s1641, 16
        %s1643 = smul.addr %s1642, 8
        %s1644 = scalar_lea.vmem %s6, %s1643
        %s1645 = sand.u32 %s187, 1
        %s1646 = scalar_lea.sflag [#allocation3], %s1645
        %s1647 = sand.u32 %s187, 1
        %s1648 = smul.addr %s1647, 32
        %s1649 = scalar_lea.vmem [#allocation2], %s1648
        // Predicated region
        $region45: #{emau_forward.1} parent=43 // pred_check
          %p1650 = pneg %p171
        $region46: #{emau_forward.1} parent=43 // pred_check_branch
          %1652 = sbr.rel (%p1650) target = $region48
        $region47: #{emau_forward.1} parent=43 // pred_region
          _
        $region48: #{emau_forward.1} parent=43 // pred_fallthru
          _
        // Predicated region
        $region49: #{emau_forward.1} parent=43 // pred_check
          %p1653 = pneg %p197
        $region50: #{emau_forward.1} parent=43 // pred_check_branch
          %1655 = sbr.rel (%p1653) target = $region52
        $region51: #{emau_forward.1} parent=43 // pred_region
          %s1657 = ssub.s32 512, 512
          %1658 = vsyncadd %s1646, %s1657
          %s1659 = smul.addr %s22, 4
          %s1660 = smul.addr %s1659, 128
          %s1661 = scalar_lea.hbm %s7, %s1660
          %s1662 = sshll.u32 %s1649, 4
          %s1663 = int_to_ptr.vmem [resolvable:$true] %s1662
          %1668 = dma.vmem_to_hbm [thread:$0]  %s1663, 512, %s1661, %s1646, 128, 128, 8
        $region52: #{emau_forward.1} parent=43 // pred_fallthru
          _
      $region44: #{emau_forward.1} parent=5 // pred_fallthru
        _
      %p1669 = scmp.le.s32.totalorder 2, %s17
      // Predicated region
      $region53: #{emau_forward.1} parent=5 // pred_check
        %p1670 = pneg %p1669
      $region54: #{emau_forward.1} parent=5 // pred_check_branch
        %1672 = sbr.rel (%p1670) target = $region56
      $region55: #{emau_forward.1} parent=5 // pred_region
        %s1673 = ssub.s32 %s17, 2
        // Predicated region
        $region57: #{emau_forward.1} parent=55 // pred_check
          %p1674 = pneg %p177
        $region58: #{emau_forward.1} parent=55 // pred_check_branch
          %1676 = sbr.rel (%p1674) target = $region60
        $region59: #{emau_forward.1} parent=55 // pred_region
          %p1677 = scmp.lt.s32.totalorder %s23, 1
          %s1678 = scalar_select %p1677, %s23, 1
          %s1679 = smul.addr %s1678, 16
          %s1680 = smul.addr %s1679, 8
          %s1681 = scalar_lea.vmem %s6, %s1680
        $region60: #{emau_forward.1} parent=55 // pred_fallthru
          _
        // Predicated region
        $region61: #{emau_forward.1} parent=55 // pred_check
          %p1682 = pneg %p203
        $region62: #{emau_forward.1} parent=55 // pred_check_branch
          %1684 = sbr.rel (%p1682) target = $region64
        $region63: #{emau_forward.1} parent=55 // pred_region
          %s1685 = sand.u32 %s188, 1
          %s1686 = scalar_lea.sflag [#allocation3], %s1685
          %s1687 = sand.u32 %s188, 1
          %s1688 = smul.addr %s1687, 32
          %s1689 = scalar_lea.vmem [#allocation2], %s1688
          %1690 = dma.done %s1686, 512
        $region64: #{emau_forward.1} parent=55 // pred_fallthru
          _
      $region56: #{emau_forward.1} parent=5 // pred_fallthru
        _
    $region6: #{emau_forward.1} parent=1 // loop_footer
      %s21 = sadd.s32 1, %s17
    $region7: #{emau_forward.1} parent=1 // loop_footer_branch
      %16 = sbr.rel target = $region3
    $region8: #{emau_forward.1} parent=1 // loop_exit
      _
    %1691 = vsyncpa [#allocation3], 1
    %s1692 = scalar_lea.sflag [#allocation3], 1
    %1693 = vsyncpa %s1692, 1

</llo_original>
